<compile_context>
chip_gen: v7x
topology: tpu7x:2x2x1
jax: 0.10.0
libtpu: 0.0.40
codegen_flags: <defaults>
</compile_context>

<pallas_src>
import jax
import jax.numpy as jnp
from jax.experimental import pallas as pl
from jax.experimental.pallas import tpu as pltpu

PAD_TOKEN = 0
LANE = 128
ROW_BLOCK = 128   # batch rows per grid step == MXU lane width (use 256 on v6e/v7x)


def _round_up(x, m):
    return (x + m - 1) // m * m


def make_two_tower_kernel(n_layers, s_pad, v_pad, row_block, pad_token):
    """Fused kernel: masked mean-pool embedding lookup + selected-tower MLP, feature-major."""

    def kernel(tok_ref, emb_ref, *refs):
        out_ref = refs[-1]
        wb = refs[:-1]                       # (w0, b0, w1, b1, ...) of the selected tower

        # ---------------- masked mean pooling (feature-major) ----------------
        # hist[v, r] = #occurrences of vocab id v in batch row r over all S_pad positions.
        # Per-position VPU accumulate: cost linear in row_block, no seg matmul, no flatten.
        sub_iota = jax.lax.broadcasted_iota(jnp.int32, (v_pad, row_block), 0)

        def hist_step(s, h):
            tok_row = tok_ref[pl.ds(s, 1), :]                          # (1, TB) int32
            return h + (tok_row == sub_iota).astype(jnp.float32)

        hist = jax.lax.fori_loop(
            0, s_pad, hist_step,
            jnp.zeros((v_pad, row_block), jnp.float32),
            unroll=True if s_pad <= 32 else 8)

        # Every position holds exactly one id, so #valid = S_pad - #pad occurrences.
        valid = jnp.float32(s_pad) - hist[pad_token:pad_token + 1, :]  # (1, TB) f32
        inv = pl.reciprocal(jnp.maximum(valid, 1e-8), approx=False)

        # pooled_sum[e, r] = sum_v emb_T[e, v] * hist[v, r]; pad column of emb_T is zero,
        # so pad tokens contribute nothing.  hist -> bf16 is exact for counts <= 256.
        pooled_sum = jnp.dot(emb_ref[...], hist.astype(jnp.bfloat16),
                             preferred_element_type=jnp.float32)       # (E_pad, TB) f32
        x = pooled_sum * inv                                           # masked mean, f32

        # ---------------- selected tower MLP (weights in torch (out, in) layout) --------
        for l in range(n_layers):
            w = wb[2 * l][...]                                         # (out_pad, in_pad) bf16
            b = wb[2 * l + 1][...]                                     # (out_pad, 1) f32
            x = jnp.dot(w, x.astype(jnp.bfloat16),
                        preferred_element_type=jnp.float32) + b
            x = jnp.maximum(x, 0.0)        # ReLU after every layer, incl. last (matches module)
        out_ref[...] = x

    return kernel


def two_tower_forward(query_input, pos_answer_input, neg_answer_input,
                      emb, query_ws, query_bs, answer_ws, answer_bs,
                      pad_token=PAD_TOKEN, row_block=ROW_BLOCK):
    """Fused forward for all three inputs; returns (query, pos, neg) tower outputs."""
    emb = jnp.asarray(emb, jnp.float32)
    vocab, emb_dims = emb.shape
    batch = query_input.shape[0]

    n_layers = len(query_ws)
    if len(answer_ws) != n_layers:
        # TODO(synk): unequal tower depths need a dual-codepath kernel (pl.when) again.
        raise NotImplementedError("stacked-tower kernel assumes equal layer counts")

    # ---- tokens: (S_pad, rows_pad) int32, batch rows on the lane axis (lane-dense blocks)
    s_max = max(query_input.shape[1], pos_answer_input.shape[1], neg_answer_input.shape[1])
    s_pad = _round_up(s_max, 8)

    def prep_tokens(t):
        t = jnp.asarray(t, jnp.int32)
        return jnp.pad(t, ((0, 0), (0, s_pad - t.shape[1])), constant_values=pad_token)

    q_tok = prep_tokens(query_input)
    a_tok = jnp.concatenate([prep_tokens(pos_answer_input),
                             prep_tokens(neg_answer_input)], axis=0)
    bq_pad = _round_up(batch, row_block)
    ba_pad = _round_up(2 * batch, row_block)
    q_tok = jnp.pad(q_tok, ((0, bq_pad - batch), (0, 0)), constant_values=pad_token)
    a_tok = jnp.pad(a_tok, ((0, ba_pad - 2 * batch), (0, 0)), constant_values=pad_token)
    rows_pad = bq_pad + ba_pad
    tok_t = jnp.concatenate([q_tok, a_tok], axis=0).T                   # (S_pad, rows_pad)

    # ---- embedding table: transposed, pad column zeroed, lane-dense, bf16, resident ----
    v_pad = _round_up(vocab, LANE)
    e_pad = _round_up(emb_dims, LANE)
    emb_z = emb.at[pad_token].set(0.0)
    emb_t = jnp.zeros((e_pad, v_pad), jnp.float32).at[:emb_dims, :vocab].set(emb_z.T)
    emb_t = emb_t.astype(jnp.bfloat16)
    # TODO(synk): for production vocab / sequence sizes, stream the table over a trailing
    # "arbitrary" vocab grid axis (VMEM pooled-sum accumulator + pl.when init/finalize,
    # pl.Buffered(3) on the emb BlockSpec), or replace the one-hot histogram with a
    # scalar-prefetch DMA-gather pooling path.

    # ---- towers: (query, answer) stacked on a leading size-2 axis, torch (out, in) layout
    w_stacks, b_stacks = [], []
    in_pad = e_pad
    for l in range(n_layers):
        qw = jnp.asarray(query_ws[l], jnp.float32)
        qb = jnp.asarray(query_bs[l], jnp.float32)
        aw = jnp.asarray(answer_ws[l], jnp.float32)
        ab = jnp.asarray(answer_bs[l], jnp.float32)
        qo, qi = qw.shape
        ao, ai = aw.shape
        out_pad = _round_up(max(qo, ao), LANE)
        w = jnp.zeros((2, out_pad, in_pad), jnp.float32)
        w = w.at[0, :qo, :qi].set(qw).at[1, :ao, :ai].set(aw)
        b = jnp.zeros((2, out_pad, 1), jnp.float32)
        b = b.at[0, :qo, 0].set(qb).at[1, :ao, 0].set(ab)
        w_stacks.append(w.astype(jnp.bfloat16))
        b_stacks.append(b)
        in_pad = out_pad
    assert in_pad == e_pad, "last layer of both towers must output emb_dims"

    nq_blocks = bq_pad // row_block
    n_blocks = rows_pad // row_block

    def tower_sel(i):                      # block -> tower (0 = query, 1 = answer)
        return jnp.where(i < nq_blocks, 0, 1)

    in_specs = [
        pl.BlockSpec((s_pad, row_block), lambda i: (0, i)),        # tokens: per row block
        pl.BlockSpec(emb_t.shape, lambda i: (0, 0)),               # emb_T: resident
    ]
    wb_args = []
    for w, b in zip(w_stacks, b_stacks):
        wb_args += [w, b]
        in_specs += [
            pl.BlockSpec((None,) + w.shape[1:], lambda i: (tower_sel(i), 0, 0)),
            pl.BlockSpec((None,) + b.shape[1:], lambda i: (tower_sel(i), 0, 0)),
        ]
    out_specs = pl.BlockSpec((e_pad, row_block), lambda i: (0, i))

    # Advisory cost hints for XLA scheduling around the custom call.
    pool_flops = 2 * e_pad * v_pad * row_block
    tower_flops = sum(2 * w.shape[1] * w.shape[2] * row_block for w in w_stacks)
    flops = n_blocks * (pool_flops + tower_flops)
    bytes_accessed = (int(tok_t.size) * 4 + int(emb_t.size) * 2
                      + sum(int(w.size) * 2 + int(b.size) * 4
                            for w, b in zip(w_stacks, b_stacks))
                      + e_pad * rows_pad * 4)

    kernel = make_two_tower_kernel(n_layers, s_pad, v_pad, row_block, pad_token)

    out_t = pl.pallas_call(
        kernel,
        grid=(n_blocks,),
        in_specs=in_specs,
        out_specs=out_specs,
        out_shape=jax.ShapeDtypeStruct((e_pad, rows_pad), jnp.float32),
        compiler_params=pltpu.CompilerParams(
            dimension_semantics=("parallel",),
            # 48 MiB is safe on v7x (64 MiB/TC); v5e/v6e (128 MiB) can raise toward ~100 MiB
            # before the resident table must be streamed.
            vmem_limit_bytes=48 * 1024 * 1024,
        ),
        cost_estimate=pl.CostEstimate(flops=int(flops), transcendentals=0,
                                      bytes_accessed=int(bytes_accessed)),
    )(tok_t, emb_t, *wb_args)

    q_out = out_t[:emb_dims, :batch].T
    p_out = out_t[:emb_dims, bq_pad:bq_pad + batch].T
    n_out = out_t[:emb_dims, bq_pad + batch:bq_pad + 2 * batch].T
    return q_out, p_out, n_out


# ------------------------- pure-JAX reference (mirrors kernel numerics) -------------------------
def ref_two_tower(query_input, pos_answer_input, neg_answer_input,
                  emb, query_ws, query_bs, answer_ws, answer_bs, pad_token=PAD_TOKEN):
    emb_bf = jnp.asarray(emb, jnp.float32).astype(jnp.bfloat16)

    def pool(tokens):
        tokens = jnp.asarray(tokens, jnp.int32)
        mask = tokens != pad_token
        gathered = emb_bf[tokens].astype(jnp.float32)                   # (B, S, E)
        summed = jnp.sum(jnp.where(mask[..., None], gathered, 0.0), axis=1)
        counts = jnp.sum(mask, axis=1, keepdims=True).astype(jnp.float32)
        return summed / jnp.maximum(counts, 1e-8)

    def tower(x, ws, bs):
        for w, b in zip(ws, bs):
            w_bf = jnp.asarray(w, jnp.float32).astype(jnp.bfloat16)
            y = jnp.dot(x.astype(jnp.bfloat16), w_bf.T,
                        preferred_element_type=jnp.float32) + jnp.asarray(b, jnp.float32)
            x = jnp.maximum(y, 0.0)
        return x

    q = tower(pool(query_input), query_ws, query_bs)
    p = tower(pool(pos_answer_input), answer_ws, answer_bs)
    n = tower(pool(neg_answer_input), answer_ws, answer_bs)
    return q, p, n


if __name__ == "__main__":
    vocab_size = 64
    emb_dims = 32
    query_tower_layers = 2
    answer_tower_layers = 2
    query_tower_hidden_dim = 64
    answer_tower_hidden_dim = 48
    batch = 4
    seq = 8

    key = jax.random.PRNGKey(0)
    k_emb, k_q, k_p, k_n, k_w = jax.random.split(key, 5)

    embedding_matrix = jax.random.normal(k_emb, (vocab_size, emb_dims), jnp.float32) * 0.1

    def make_tokens(k):
        toks = jax.random.randint(k, (batch, seq), 1, vocab_size, jnp.int32)
        pad_mask = jax.random.bernoulli(jax.random.fold_in(k, 7), 0.25, (batch, seq))
        toks = jnp.where(pad_mask, PAD_TOKEN, toks)
        return toks.at[:, 0].set(jnp.maximum(toks[:, 0], 1))   # keep every row non-empty

    query_input = make_tokens(k_q)
    pos_answer_input = make_tokens(k_p)
    neg_answer_input = make_tokens(k_n)

    def make_tower_params(key, n_layers, hidden_dim):
        ws, bs = [], []
        in_dim = emb_dims
        for i in range(n_layers):
            out_dim = emb_dims if i == n_layers - 1 else hidden_dim
            key, kw, kb = jax.random.split(key, 3)
            ws.append(jax.random.normal(kw, (out_dim, in_dim), jnp.float32) * 0.1)
            bs.append(jax.random.normal(kb, (out_dim,), jnp.float32) * 0.01)
            in_dim = out_dim
        return ws, bs

    k_wq, k_wa = jax.random.split(k_w)
    query_ws, query_bs = make_tower_params(k_wq, query_tower_layers, query_tower_hidden_dim)
    answer_ws, answer_bs = make_tower_params(k_wa, answer_tower_layers, answer_tower_hidden_dim)

    q_out, p_out, n_out = two_tower_forward(
        query_input, pos_answer_input, neg_answer_input,
        embedding_matrix, query_ws, query_bs, answer_ws, answer_bs)
    jax.block_until_ready((q_out, p_out, n_out))

    q_ref, p_ref, n_ref = ref_two_tower(
        query_input, pos_answer_input, neg_answer_input,
        embedding_matrix, query_ws, query_bs, answer_ws, answer_bs)

    for got, want in ((q_out, q_ref), (p_out, p_ref), (n_out, n_ref)):
        assert got.shape == want.shape, (got.shape, want.shape)
        assert jnp.allclose(got, want, atol=5e-4, rtol=5e-3), \
            float(jnp.max(jnp.abs(got - want)))

    # TODO(synk): the PyTorch ragged-list pad_sequence / empty-sequence ValueError path has
    # no kernel equivalent; inputs here are fixed-width (B, S) token arrays.
    print("KERNEL_OK")
</pallas_src>

<mosaic_0001>
module attributes {stable_mosaic.version = 11 : i64} {
  func.func @kernel(%arg0: i32, %arg1: memref<8x128xi32, #tpu.memory_space<vmem>>, %arg2: memref<128x128xbf16, #tpu.memory_space<vmem>>, %arg3: memref<1x128x128xbf16, #tpu.memory_space<vmem>>, %arg4: memref<1x128x1xf32, #tpu.memory_space<vmem>>, %arg5: memref<1x128x128xbf16, #tpu.memory_space<vmem>>, %arg6: memref<1x128x1xf32, #tpu.memory_space<vmem>>, %arg7: memref<128x128xf32, #tpu.memory_space<vmem>>) attributes {dimension_semantics = [#tpu.dimension_semantics<parallel>], iteration_bounds = array<i64: 2>, scalar_prefetch = 0 : i64, scratch_operands = 0 : i64, tpu.core_type = #tpu.core_type<tc>, window_params = [{transform_indices = @transform_0, window_bounds = array<i64: 8, 128>}, {pipeline_mode = #tpu.pipeline_mode<synchronous>, transform_indices = @transform_1, window_bounds = array<i64: 128, 128>}, {transform_indices = @transform_2, window_bounds = array<i64: 1, 128, 128>}, {transform_indices = @transform_3, window_bounds = array<i64: 1, 128, 1>}, {transform_indices = @transform_4, window_bounds = array<i64: 1, 128, 128>}, {transform_indices = @transform_5, window_bounds = array<i64: 1, 128, 1>}, {transform_indices = @transform_6, window_bounds = array<i64: 128, 128>}]} {
    %0 = tpu.iota {dimensions = array<i32: 0>} : vector<128x128xi32>
    %cst = arith.constant 0.000000e+00 : f32
    %1 = vector.broadcast %cst : f32 to vector<128x128xf32>
    %c0_i32 = arith.constant 0 : i32
    %2 = arith.index_cast %c0_i32 : i32 to index
    %c0 = arith.constant 0 : index
    %3 = vector.load %arg1[%2, %c0] : memref<8x128xi32, #tpu.memory_space<vmem>>, vector<1x128xi32>
    %4 = vector.broadcast %3 : vector<1x128xi32> to vector<128x128xi32>
    %5 = arith.cmpi eq, %4, %0 : vector<128x128xi32>
    %6 = arith.extui %5 : vector<128x128xi1> to vector<128x128xi32>
    %7 = arith.sitofp %6 : vector<128x128xi32> to vector<128x128xf32>
    %8 = arith.addf %1, %7 : vector<128x128xf32>
    %c1_i32 = arith.constant 1 : i32
    %9 = arith.index_cast %c1_i32 : i32 to index
    %c0_0 = arith.constant 0 : index
    %10 = vector.load %arg1[%9, %c0_0] : memref<8x128xi32, #tpu.memory_space<vmem>>, vector<1x128xi32>
    %11 = vector.broadcast %10 : vector<1x128xi32> to vector<128x128xi32>
    %12 = arith.cmpi eq, %11, %0 : vector<128x128xi32>
    %13 = arith.extui %12 : vector<128x128xi1> to vector<128x128xi32>
    %14 = arith.sitofp %13 : vector<128x128xi32> to vector<128x128xf32>
    %15 = arith.addf %8, %14 : vector<128x128xf32>
    %c2_i32 = arith.constant 2 : i32
    %16 = arith.index_cast %c2_i32 : i32 to index
    %c0_1 = arith.constant 0 : index
    %17 = vector.load %arg1[%16, %c0_1] : memref<8x128xi32, #tpu.memory_space<vmem>>, vector<1x128xi32>
    %18 = vector.broadcast %17 : vector<1x128xi32> to vector<128x128xi32>
    %19 = arith.cmpi eq, %18, %0 : vector<128x128xi32>
    %20 = arith.extui %19 : vector<128x128xi1> to vector<128x128xi32>
    %21 = arith.sitofp %20 : vector<128x128xi32> to vector<128x128xf32>
    %22 = arith.addf %15, %21 : vector<128x128xf32>
    %c3_i32 = arith.constant 3 : i32
    %23 = arith.index_cast %c3_i32 : i32 to index
    %c0_2 = arith.constant 0 : index
    %24 = vector.load %arg1[%23, %c0_2] : memref<8x128xi32, #tpu.memory_space<vmem>>, vector<1x128xi32>
    %25 = vector.broadcast %24 : vector<1x128xi32> to vector<128x128xi32>
    %26 = arith.cmpi eq, %25, %0 : vector<128x128xi32>
    %27 = arith.extui %26 : vector<128x128xi1> to vector<128x128xi32>
    %28 = arith.sitofp %27 : vector<128x128xi32> to vector<128x128xf32>
    %29 = arith.addf %22, %28 : vector<128x128xf32>
    %c4_i32 = arith.constant 4 : i32
    %30 = arith.index_cast %c4_i32 : i32 to index
    %c0_3 = arith.constant 0 : index
    %31 = vector.load %arg1[%30, %c0_3] : memref<8x128xi32, #tpu.memory_space<vmem>>, vector<1x128xi32>
    %32 = vector.broadcast %31 : vector<1x128xi32> to vector<128x128xi32>
    %33 = arith.cmpi eq, %32, %0 : vector<128x128xi32>
    %34 = arith.extui %33 : vector<128x128xi1> to vector<128x128xi32>
    %35 = arith.sitofp %34 : vector<128x128xi32> to vector<128x128xf32>
    %36 = arith.addf %29, %35 : vector<128x128xf32>
    %c5_i32 = arith.constant 5 : i32
    %37 = arith.index_cast %c5_i32 : i32 to index
    %c0_4 = arith.constant 0 : index
    %38 = vector.load %arg1[%37, %c0_4] : memref<8x128xi32, #tpu.memory_space<vmem>>, vector<1x128xi32>
    %39 = vector.broadcast %38 : vector<1x128xi32> to vector<128x128xi32>
    %40 = arith.cmpi eq, %39, %0 : vector<128x128xi32>
    %41 = arith.extui %40 : vector<128x128xi1> to vector<128x128xi32>
    %42 = arith.sitofp %41 : vector<128x128xi32> to vector<128x128xf32>
    %43 = arith.addf %36, %42 : vector<128x128xf32>
    %c6_i32 = arith.constant 6 : i32
    %44 = arith.index_cast %c6_i32 : i32 to index
    %c0_5 = arith.constant 0 : index
    %45 = vector.load %arg1[%44, %c0_5] : memref<8x128xi32, #tpu.memory_space<vmem>>, vector<1x128xi32>
    %46 = vector.broadcast %45 : vector<1x128xi32> to vector<128x128xi32>
    %47 = arith.cmpi eq, %46, %0 : vector<128x128xi32>
    %48 = arith.extui %47 : vector<128x128xi1> to vector<128x128xi32>
    %49 = arith.sitofp %48 : vector<128x128xi32> to vector<128x128xf32>
    %50 = arith.addf %43, %49 : vector<128x128xf32>
    %c7_i32 = arith.constant 7 : i32
    %51 = arith.index_cast %c7_i32 : i32 to index
    %c0_6 = arith.constant 0 : index
    %52 = vector.load %arg1[%51, %c0_6] : memref<8x128xi32, #tpu.memory_space<vmem>>, vector<1x128xi32>
    %53 = vector.broadcast %52 : vector<1x128xi32> to vector<128x128xi32>
    %54 = arith.cmpi eq, %53, %0 : vector<128x128xi32>
    %55 = arith.extui %54 : vector<128x128xi1> to vector<128x128xi32>
    %56 = arith.sitofp %55 : vector<128x128xi32> to vector<128x128xf32>
    %57 = arith.addf %50, %56 : vector<128x128xf32>
    %c8_i32 = arith.constant 8 : i32
    %58 = vector.extract_strided_slice %57 {offsets = [0, 0], sizes = [1, 128], strides = [1, 1]} : vector<128x128xf32> to vector<1x128xf32>
    %cst_7 = arith.constant 8.000000e+00 : f32
    %59 = vector.broadcast %cst_7 : f32 to vector<1x128xf32>
    %60 = arith.subf %59, %58 : vector<1x128xf32>
    %cst_8 = arith.constant 9.99999993E-9 : f32
    %61 = vector.broadcast %cst_8 : f32 to vector<1x128xf32>
    %62 = arith.maximumf %60, %61 : vector<1x128xf32>
    %63 = tpu.reciprocal %62 : vector<1x128xf32> -> vector<1x128xf32>
    %c0_9 = arith.constant 0 : index
    %c0_10 = arith.constant 0 : index
    %64 = vector.load %arg2[%c0_9, %c0_10] : memref<128x128xbf16, #tpu.memory_space<vmem>>, vector<128x128xbf16>
    %65 = arith.truncf %57 : vector<128x128xf32> to vector<128x128xbf16>
    %cst_11 = arith.constant dense<0.000000e+00> : vector<128x128xf32>
    %66 = tpu.matmul %64, %65, %cst_11 {dimension_numbers = #tpu.dot_dimension_numbers<[1], [0], [0], [1], [0, 0, 1, 1], [], []>} : vector<128x128xbf16>, vector<128x128xbf16>, vector<128x128xf32> -> vector<128x128xf32>
    %67 = vector.broadcast %63 : vector<1x128xf32> to vector<128x128xf32>
    %68 = arith.mulf %66, %67 : vector<128x128xf32>
    %c0_12 = arith.constant 0 : index
    %c0_13 = arith.constant 0 : index
    %c0_14 = arith.constant 0 : index
    %69 = vector.load %arg3[%c0_12, %c0_13, %c0_14] : memref<1x128x128xbf16, #tpu.memory_space<vmem>>, vector<1x128x128xbf16>
    %70 = vector.shape_cast %69 : vector<1x128x128xbf16> to vector<128x128xbf16>
    %c0_15 = arith.constant 0 : index
    %c0_16 = arith.constant 0 : index
    %c0_17 = arith.constant 0 : index
    %71 = vector.load %arg4[%c0_15, %c0_16, %c0_17] : memref<1x128x1xf32, #tpu.memory_space<vmem>>, vector<1x128x1xf32>
    %72 = vector.shape_cast %71 : vector<1x128x1xf32> to vector<128x1xf32>
    %73 = arith.truncf %68 : vector<128x128xf32> to vector<128x128xbf16>
    %cst_18 = arith.constant dense<0.000000e+00> : vector<128x128xf32>
    %74 = tpu.matmul %70, %73, %cst_18 {dimension_numbers = #tpu.dot_dimension_numbers<[1], [0], [0], [1], [0, 0, 1, 1], [], []>} : vector<128x128xbf16>, vector<128x128xbf16>, vector<128x128xf32> -> vector<128x128xf32>
    %75 = vector.broadcast %72 : vector<128x1xf32> to vector<128x128xf32>
    %76 = arith.addf %74, %75 : vector<128x128xf32>
    %cst_19 = arith.constant 0.000000e+00 : f32
    %77 = vector.broadcast %cst_19 : f32 to vector<128x128xf32>
    %78 = arith.maximumf %76, %77 : vector<128x128xf32>
    %c0_20 = arith.constant 0 : index
    %c0_21 = arith.constant 0 : index
    %c0_22 = arith.constant 0 : index
    %79 = vector.load %arg5[%c0_20, %c0_21, %c0_22] : memref<1x128x128xbf16, #tpu.memory_space<vmem>>, vector<1x128x128xbf16>
    %80 = vector.shape_cast %79 : vector<1x128x128xbf16> to vector<128x128xbf16>
    %c0_23 = arith.constant 0 : index
    %c0_24 = arith.constant 0 : index
    %c0_25 = arith.constant 0 : index
    %81 = vector.load %arg6[%c0_23, %c0_24, %c0_25] : memref<1x128x1xf32, #tpu.memory_space<vmem>>, vector<1x128x1xf32>
    %82 = vector.shape_cast %81 : vector<1x128x1xf32> to vector<128x1xf32>
    %83 = arith.truncf %78 : vector<128x128xf32> to vector<128x128xbf16>
    %cst_26 = arith.constant dense<0.000000e+00> : vector<128x128xf32>
    %84 = tpu.matmul %80, %83, %cst_26 {dimension_numbers = #tpu.dot_dimension_numbers<[1], [0], [0], [1], [0, 0, 1, 1], [], []>} : vector<128x128xbf16>, vector<128x128xbf16>, vector<128x128xf32> -> vector<128x128xf32>
    %85 = vector.broadcast %82 : vector<128x1xf32> to vector<128x128xf32>
    %86 = arith.addf %84, %85 : vector<128x128xf32>
    %cst_27 = arith.constant 0.000000e+00 : f32
    %87 = vector.broadcast %cst_27 : f32 to vector<128x128xf32>
    %88 = arith.maximumf %86, %87 : vector<128x128xf32>
    %c0_28 = arith.constant 0 : index
    %c0_29 = arith.constant 0 : index
    %89 = vector.load %arg7[%c0_28, %c0_29] : memref<128x128xf32, #tpu.memory_space<vmem>>, vector<128x128xf32>
    tpu.vector_store %arg7[%c0_28, %c0_29], %88 {strides = array<i32>} : memref<128x128xf32, #tpu.memory_space<vmem>>, vector<128x128xf32>,
    return
  }
  func.func @transform_0(%arg0: i32) -> (i32, i32) {
    %c0_i32 = arith.constant 0 : i32
    %c0_i32_0 = arith.constant 0 : i32
    return %c0_i32, %arg0 : i32, i32
  }
  func.func @transform_1(%arg0: i32) -> (i32, i32) {
    %c0_i32 = arith.constant 0 : i32
    %c0_i32_0 = arith.constant 0 : i32
    %c0_i32_1 = arith.constant 0 : i32
    return %c0_i32, %c0_i32_0 : i32, i32
  }
  func.func @transform_2(%arg0: i32) -> (i32, i32, i32) {
    %c1_i32 = arith.constant 1 : i32
    %0 = arith.cmpi slt, %arg0, %c1_i32 : i32
    %c0_i32 = arith.constant 0 : i32
    %c1_i32_0 = arith.constant 1 : i32
    %1 = arith.select %0, %c0_i32, %c1_i32_0 : i32
    %c0_i32_1 = arith.constant 0 : i32
    %c0_i32_2 = arith.constant 0 : i32
    %c0_i32_3 = arith.constant 0 : i32
    return %1, %c0_i32_1, %c0_i32_2 : i32, i32, i32
  }
  func.func @transform_3(%arg0: i32) -> (i32, i32, i32) {
    %c1_i32 = arith.constant 1 : i32
    %0 = arith.cmpi slt, %arg0, %c1_i32 : i32
    %c0_i32 = arith.constant 0 : i32
    %c1_i32_0 = arith.constant 1 : i32
    %1 = arith.select %0, %c0_i32, %c1_i32_0 : i32
    %c0_i32_1 = arith.constant 0 : i32
    %c0_i32_2 = arith.constant 0 : i32
    %c0_i32_3 = arith.constant 0 : i32
    return %1, %c0_i32_1, %c0_i32_2 : i32, i32, i32
  }
  func.func @transform_4(%arg0: i32) -> (i32, i32, i32) {
    %c1_i32 = arith.constant 1 : i32
    %0 = arith.cmpi slt, %arg0, %c1_i32 : i32
    %c0_i32 = arith.constant 0 : i32
    %c1_i32_0 = arith.constant 1 : i32
    %1 = arith.select %0, %c0_i32, %c1_i32_0 : i32
    %c0_i32_1 = arith.constant 0 : i32
    %c0_i32_2 = arith.constant 0 : i32
    %c0_i32_3 = arith.constant 0 : i32
    return %1, %c0_i32_1, %c0_i32_2 : i32, i32, i32
  }
  func.func @transform_5(%arg0: i32) -> (i32, i32, i32) {
    %c1_i32 = arith.constant 1 : i32
    %0 = arith.cmpi slt, %arg0, %c1_i32 : i32
    %c0_i32 = arith.constant 0 : i32
    %c1_i32_0 = arith.constant 1 : i32
    %1 = arith.select %0, %c0_i32, %c1_i32_0 : i32
    %c0_i32_1 = arith.constant 0 : i32
    %c0_i32_2 = arith.constant 0 : i32
    %c0_i32_3 = arith.constant 0 : i32
    return %1, %c0_i32_1, %c0_i32_2 : i32, i32, i32
  }
  func.func @transform_6(%arg0: i32) -> (i32, i32) {
    %c0_i32 = arith.constant 0 : i32
    %c0_i32_0 = arith.constant 0 : i32
    return %c0_i32, %arg0 : i32, i32
  }
}

</mosaic_0001>

<llo_original>
// kernel: tpu_custom_call.1
$region0: #{tpu_custom_call.1}
  #allocation0 [shape = 'u32[]', space=smem, size = 0x4, offset = 0x4, fixed_abs, tag = 'smem constant byte address 0x4 - core index']
  #allocation1 [shape = 'u32[144,128]{1,0:T(1,128)}', space=vmem, size = 0x12000, scoped, tag = 'internal scratch']
  %s0 = inlined_call_operand.vmem [shape: s32[8,256], index: 0, kind: input, shape index: {}]
  %s1 = inlined_call_operand.vmem [shape: bf16[128,128], index: 1, kind: input, shape index: {}]
  %s2 = inlined_call_operand.vmem [shape: bf16[2,128,128], index: 2, kind: input, shape index: {}]
  %s3 = inlined_call_operand.vmem [shape: f32[2,128,1], index: 3, kind: input, shape index: {}]
  %s4 = inlined_call_operand.vmem [shape: bf16[2,128,128], index: 4, kind: input, shape index: {}]
  %s5 = inlined_call_operand.vmem [shape: f32[2,128,1], index: 5, kind: input, shape index: {}]
  %s6 = inlined_call_operand.hbm [shape: f32[128,256], index: 6, kind: output, shape index: {}]
  %s7 = sld [smem:[#allocation0]]
  $region57: #{tpu_custom_call.1} parent=0
    _
  %s9 = ssub.s32 1, %s7
  %s10 = scalar_select 0, %s9, %s7
  $region1: #{tpu_custom_call.1} parent=0
    #allocation2 [shape = 'u8[131072]{0}', space=vmem, size = 0x20000, scoped, tag = 'output window, operand 0']
    #allocation3 [shape = 's32[2]{0}', space=sflag, size = 0x8, scoped, tag = 'scoped memory for tpu_custom_call.1']
    %11 = vsyncpa [#allocation3], 0
    %s12 = scalar_lea.sflag [#allocation3], 1
    %13 = vsyncpa %s12, 0
    loop: start=0, step=1, limit=4
    $region2: #{tpu_custom_call.1} parent=1 // loop_pre_header
      _
    $region3: #{tpu_custom_call.1} parent=1 // loop_header
      %s15 = sphi 0, %s19
      %p16 = scmp.ge.s32.totalorder %s15, 4
      %s25 = sphi 0, %s27
      %s28 = sphi 0, %s25
      %s29 = sphi 0, %s28
      %s45 = sphi 0, %s29
      %s49 = sphi 0, %s49
      %s51 = sphi 0, %s49
      %s52 = sphi 0, %s51
      %s66 = sphi 0, %s52
      %s76 = sphi 0, %s78
      %s79 = sphi 0, %s76
      %s80 = sphi 0, %s79
      %s96 = sphi 0, %s80
      %s106 = sphi 0, %s108
      %s109 = sphi 0, %s106
      %s110 = sphi 0, %s109
      %s126 = sphi 0, %s110
      %s136 = sphi 0, %s138
      %s139 = sphi 0, %s136
      %s140 = sphi 0, %s139
      %s156 = sphi 0, %s140
      %s166 = sphi 0, %s168
      %s169 = sphi 0, %s166
      %s170 = sphi 0, %s169
      %s186 = sphi 0, %s170
      %s192 = sphi 0, %s194
      %s195 = sphi 0, %s192
      %s196 = sphi 0, %s195
      %s212 = sphi 0, %s196
    $region4: #{tpu_custom_call.1} parent=1 // loop_header_branch
      %18 = sbr.rel (%p16) target = $region8
    $region5: #{tpu_custom_call.1} parent=1 // loop_body
      %s20 = ssub.s32 %s15, 1
      %s21 = ssub.s32 %s15, 2
      %s22 = sadd.s32 %s15, 1
      %s23 = ssub.s32 %s15, %s22
      %p24 = scmp.eq.s32.totalorder %s23, 0
      %s26 = sadd.s32 %s25, 1
      %s27 = scalar_select %p24, %s25, %s26
      %p30 = pneg %p24
      %p31 = scmp.eq.s32.totalorder %s15, 1
      %p32 = por %p30, %p31
      %p33 = scmp.ne.s32.totalorder %s25, %s28
      %p34 = scmp.eq.s32.totalorder %s15, 0
      %p35 = por %p33, %p34
      %p36 = scmp.ne.s32.totalorder %s25, %s28
      %p37 = scmp.eq.s32.totalorder %s20, 1
      %p38 = por %p36, %p37
      %p39 = scmp.ne.s32.totalorder %s28, %s29
      %p40 = scmp.eq.s32.totalorder %s20, 0
      %p41 = por %p39, %p40
      %p42 = scmp.ne.s32.totalorder %s28, %s29
      %p43 = scmp.eq.s32.totalorder %s21, 1
      %p44 = por %p42, %p43
      %p46 = scmp.ne.s32.totalorder %s29, %s45
      %p47 = scmp.eq.s32.totalorder %s21, 0
      %p48 = por %p46, %p47
      %s50 = sadd.s32 %s49, 1
      %p53 = scmp.eq.s32.totalorder %s15, 1
      %p54 = scmp.ne.s32.totalorder %s49, %s51
      %p55 = scmp.eq.s32.totalorder %s15, 0
      %p56 = por %p54, %p55
      %p57 = scmp.ne.s32.totalorder %s49, %s51
      %p58 = scmp.eq.s32.totalorder %s20, 1
      %p59 = por %p57, %p58
      %p60 = scmp.ne.s32.totalorder %s51, %s52
      %p61 = scmp.eq.s32.totalorder %s20, 0
      %p62 = por %p60, %p61
      %p63 = scmp.ne.s32.totalorder %s51, %s52
      %p64 = scmp.eq.s32.totalorder %s21, 1
      %p65 = por %p63, %p64
      %p67 = scmp.ne.s32.totalorder %s52, %s66
      %p68 = scmp.eq.s32.totalorder %s21, 0
      %p69 = por %p67, %p68
      %p70 = scmp.ge.s32.totalorder %s15, 1
      %s71 = scalar_select %p70, 1, 0
      %p72 = scmp.ge.s32.totalorder %s22, 1
      %s73 = scalar_select %p72, 1, 0
      %s74 = ssub.s32 %s71, %s73
      %p75 = scmp.eq.s32.totalorder %s74, 0
      %s77 = sadd.s32 %s76, 1
      %s78 = scalar_select %p75, %s76, %s77
      %p81 = pneg %p75
      %p82 = scmp.eq.s32.totalorder %s15, 1
      %p83 = por %p81, %p82
      %p84 = scmp.ne.s32.totalorder %s76, %s79
      %p85 = scmp.eq.s32.totalorder %s15, 0
      %p86 = por %p84, %p85
      %p87 = scmp.ne.s32.totalorder %s76, %s79
      %p88 = scmp.eq.s32.totalorder %s20, 1
      %p89 = por %p87, %p88
      %p90 = scmp.ne.s32.totalorder %s79, %s80
      %p91 = scmp.eq.s32.totalorder %s20, 0
      %p92 = por %p90, %p91
      %p93 = scmp.ne.s32.totalorder %s79, %s80
      %p94 = scmp.eq.s32.totalorder %s21, 1
      %p95 = por %p93, %p94
      %p97 = scmp.ne.s32.totalorder %s80, %s96
      %p98 = scmp.eq.s32.totalorder %s21, 0
      %p99 = por %p97, %p98
      %p100 = scmp.ge.s32.totalorder %s15, 1
      %s101 = scalar_select %p100, 1, 0
      %p102 = scmp.ge.s32.totalorder %s22, 1
      %s103 = scalar_select %p102, 1, 0
      %s104 = ssub.s32 %s101, %s103
      %p105 = scmp.eq.s32.totalorder %s104, 0
      %s107 = sadd.s32 %s106, 1
      %s108 = scalar_select %p105, %s106, %s107
      %p111 = pneg %p105
      %p112 = scmp.eq.s32.totalorder %s15, 1
      %p113 = por %p111, %p112
      %p114 = scmp.ne.s32.totalorder %s106, %s109
      %p115 = scmp.eq.s32.totalorder %s15, 0
      %p116 = por %p114, %p115
      %p117 = scmp.ne.s32.totalorder %s106, %s109
      %p118 = scmp.eq.s32.totalorder %s20, 1
      %p119 = por %p117, %p118
      %p120 = scmp.ne.s32.totalorder %s109, %s110
      %p121 = scmp.eq.s32.totalorder %s20, 0
      %p122 = por %p120, %p121
      %p123 = scmp.ne.s32.totalorder %s109, %s110
      %p124 = scmp.eq.s32.totalorder %s21, 1
      %p125 = por %p123, %p124
      %p127 = scmp.ne.s32.totalorder %s110, %s126
      %p128 = scmp.eq.s32.totalorder %s21, 0
      %p129 = por %p127, %p128
      %p130 = scmp.ge.s32.totalorder %s15, 1
      %s131 = scalar_select %p130, 1, 0
      %p132 = scmp.ge.s32.totalorder %s22, 1
      %s133 = scalar_select %p132, 1, 0
      %s134 = ssub.s32 %s131, %s133
      %p135 = scmp.eq.s32.totalorder %s134, 0
      %s137 = sadd.s32 %s136, 1
      %s138 = scalar_select %p135, %s136, %s137
      %p141 = pneg %p135
      %p142 = scmp.eq.s32.totalorder %s15, 1
      %p143 = por %p141, %p142
      %p144 = scmp.ne.s32.totalorder %s136, %s139
      %p145 = scmp.eq.s32.totalorder %s15, 0
      %p146 = por %p144, %p145
      %p147 = scmp.ne.s32.totalorder %s136, %s139
      %p148 = scmp.eq.s32.totalorder %s20, 1
      %p149 = por %p147, %p148
      %p150 = scmp.ne.s32.totalorder %s139, %s140
      %p151 = scmp.eq.s32.totalorder %s20, 0
      %p152 = por %p150, %p151
      %p153 = scmp.ne.s32.totalorder %s139, %s140
      %p154 = scmp.eq.s32.totalorder %s21, 1
      %p155 = por %p153, %p154
      %p157 = scmp.ne.s32.totalorder %s140, %s156
      %p158 = scmp.eq.s32.totalorder %s21, 0
      %p159 = por %p157, %p158
      %p160 = scmp.ge.s32.totalorder %s15, 1
      %s161 = scalar_select %p160, 1, 0
      %p162 = scmp.ge.s32.totalorder %s22, 1
      %s163 = scalar_select %p162, 1, 0
      %s164 = ssub.s32 %s161, %s163
      %p165 = scmp.eq.s32.totalorder %s164, 0
      %s167 = sadd.s32 %s166, 1
      %s168 = scalar_select %p165, %s166, %s167
      %p171 = pneg %p165
      %p172 = scmp.eq.s32.totalorder %s15, 1
      %p173 = por %p171, %p172
      %p174 = scmp.ne.s32.totalorder %s166, %s169
      %p175 = scmp.eq.s32.totalorder %s15, 0
      %p176 = por %p174, %p175
      %p177 = scmp.ne.s32.totalorder %s166, %s169
      %p178 = scmp.eq.s32.totalorder %s20, 1
      %p179 = por %p177, %p178
      %p180 = scmp.ne.s32.totalorder %s169, %s170
      %p181 = scmp.eq.s32.totalorder %s20, 0
      %p182 = por %p180, %p181
      %p183 = scmp.ne.s32.totalorder %s169, %s170
      %p184 = scmp.eq.s32.totalorder %s21, 1
      %p185 = por %p183, %p184
      %p187 = scmp.ne.s32.totalorder %s170, %s186
      %p188 = scmp.eq.s32.totalorder %s21, 0
      %p189 = por %p187, %p188
      %s190 = ssub.s32 %s15, %s22
      %p191 = scmp.eq.s32.totalorder %s190, 0
      %s193 = sadd.s32 %s192, 1
      %s194 = scalar_select %p191, %s192, %s193
      %p197 = pneg %p191
      %p198 = scmp.eq.s32.totalorder %s15, 1
      %p199 = por %p197, %p198
      %p200 = scmp.ne.s32.totalorder %s192, %s195
      %p201 = scmp.eq.s32.totalorder %s15, 0
      %p202 = por %p200, %p201
      %p203 = scmp.ne.s32.totalorder %s192, %s195
      %p204 = scmp.eq.s32.totalorder %s20, 1
      %p205 = por %p203, %p204
      %p206 = scmp.ne.s32.totalorder %s195, %s196
      %p207 = scmp.eq.s32.totalorder %s20, 0
      %p208 = por %p206, %p207
      %p209 = scmp.ne.s32.totalorder %s195, %s196
      %p210 = scmp.eq.s32.totalorder %s21, 1
      %p211 = por %p209, %p210
      %p213 = scmp.ne.s32.totalorder %s196, %s212
      %p214 = scmp.eq.s32.totalorder %s21, 0
      %p215 = por %p213, %p214
      %p216 = scmp.le.s32.totalorder 1, %s15
      %p217 = scmp.lt.s32.totalorder %s15, 3
      %p218 = pnand %p216, %p217
      %p219 = pneg %p218
      // Predicated region
      $region9: #{tpu_custom_call.1} parent=5 // pred_check
        _
      $region10: #{tpu_custom_call.1} parent=5 // pred_check_branch
        %221 = sbr.rel (%p218) target = $region12
      $region11: #{tpu_custom_call.1} parent=5 // pred_region
        %s222 = ssub.s32 %s15, 1
        // Predicated region
        $region13: #{tpu_custom_call.1} parent=11 // pred_check
          %p223 = pneg %p62
        $region14: #{tpu_custom_call.1} parent=11 // pred_check_branch
          %225 = sbr.rel (%p223) target = $region16
        $region15: #{tpu_custom_call.1} parent=11 // pred_region
          _
        $region16: #{tpu_custom_call.1} parent=11 // pred_fallthru
          _
      $region12: #{tpu_custom_call.1} parent=5 // pred_fallthru
        _
      %p226 = scmp.lt.s32.totalorder %s15, 2
      // Predicated region
      $region17: #{tpu_custom_call.1} parent=5 // pred_check
        %p227 = pneg %p226
      $region18: #{tpu_custom_call.1} parent=5 // pred_check_branch
        %229 = sbr.rel (%p227) target = $region20
      $region19: #{tpu_custom_call.1} parent=5 // pred_region
        // Predicated region
        $region21: #{tpu_custom_call.1} parent=19 // pred_check
          %p230 = pneg %p35
        $region22: #{tpu_custom_call.1} parent=19 // pred_check_branch
          %232 = sbr.rel (%p230) target = $region24
        $region23: #{tpu_custom_call.1} parent=19 // pred_region
          %p233 = scmp.lt.s32.totalorder %s15, 1
          %s234 = scalar_select %p233, %s15, 1
          %s235 = smul.addr %s234, 8
          %s236 = scalar_lea.vmem %s0, %s235
        $region24: #{tpu_custom_call.1} parent=19 // pred_fallthru
          _
        // Predicated region
        $region25: #{tpu_custom_call.1} parent=19 // pred_check
          %p237 = pneg %p86
        $region26: #{tpu_custom_call.1} parent=19 // pred_check_branch
          %239 = sbr.rel (%p237) target = $region28
        $region27: #{tpu_custom_call.1} parent=19 // pred_region
          %p240 = scmp.ge.s32.totalorder %s15, 1
          %s241 = scalar_select %p240, 1, 0
          %p242 = scmp.lt.s32.totalorder %s241, 1
          %s243 = scalar_select %p242, %s241, 1
          %s244 = smul.addr %s243, 16
          %s245 = smul.addr %s244, 4
          %s246 = scalar_lea.vmem %s2, %s245
          %p247 = scmp.ge.s32.totalorder %s15, 1
          %s248 = scalar_select %p247, 1, 0
        $region28: #{tpu_custom_call.1} parent=19 // pred_fallthru
          _
        // Predicated region
        $region29: #{tpu_custom_call.1} parent=19 // pred_check
          %p249 = pneg %p116
        $region30: #{tpu_custom_call.1} parent=19 // pred_check_branch
          %251 = sbr.rel (%p249) target = $region32
        $region31: #{tpu_custom_call.1} parent=19 // pred_region
          %p252 = scmp.ge.s32.totalorder %s15, 1
          %s253 = scalar_select %p252, 1, 0
          %p254 = scmp.lt.s32.totalorder %s253, 1
          %s255 = scalar_select %p254, %s253, 1
          %s256 = smul.addr %s255, 16
          %s257 = smul.addr %s256, 8
          %s258 = scalar_lea.vmem %s3, %s257
          %p259 = scmp.ge.s32.totalorder %s15, 1
          %s260 = scalar_select %p259, 1, 0
        $region32: #{tpu_custom_call.1} parent=19 // pred_fallthru
          _
        // Predicated region
        $region33: #{tpu_custom_call.1} parent=19 // pred_check
          %p261 = pneg %p146
        $region34: #{tpu_custom_call.1} parent=19 // pred_check_branch
          %263 = sbr.rel (%p261) target = $region36
        $region35: #{tpu_custom_call.1} parent=19 // pred_region
          %p264 = scmp.ge.s32.totalorder %s15, 1
          %s265 = scalar_select %p264, 1, 0
          %p266 = scmp.lt.s32.totalorder %s265, 1
          %s267 = scalar_select %p266, %s265, 1
          %s268 = smul.addr %s267, 16
          %s269 = smul.addr %s268, 4
          %s270 = scalar_lea.vmem %s4, %s269
          %p271 = scmp.ge.s32.totalorder %s15, 1
          %s272 = scalar_select %p271, 1, 0
        $region36: #{tpu_custom_call.1} parent=19 // pred_fallthru
          _
        // Predicated region
        $region37: #{tpu_custom_call.1} parent=19 // pred_check
          %p273 = pneg %p176
        $region38: #{tpu_custom_call.1} parent=19 // pred_check_branch
          %275 = sbr.rel (%p273) target = $region40
        $region39: #{tpu_custom_call.1} parent=19 // pred_region
          %p276 = scmp.ge.s32.totalorder %s15, 1
          %s277 = scalar_select %p276, 1, 0
          %p278 = scmp.lt.s32.totalorder %s277, 1
          %s279 = scalar_select %p278, %s277, 1
          %s280 = smul.addr %s279, 16
          %s281 = smul.addr %s280, 8
          %s282 = scalar_lea.vmem %s5, %s281
          %p283 = scmp.ge.s32.totalorder %s15, 1
          %s284 = scalar_select %p283, 1, 0
        $region40: #{tpu_custom_call.1} parent=19 // pred_fallthru
          _
      $region20: #{tpu_custom_call.1} parent=5 // pred_fallthru
        _
      %p285 = scmp.le.s32.totalorder 1, %s15
      %p286 = scmp.lt.s32.totalorder %s15, 3
      %p287 = pnand %p285, %p286
      %p288 = pneg %p287
      // Predicated region
      $region41: #{tpu_custom_call.1} parent=5 // pred_check
        _
      $region42: #{tpu_custom_call.1} parent=5 // pred_check_branch
        %290 = sbr.rel (%p287) target = $region44
      $region43: #{tpu_custom_call.1} parent=5 // pred_region
        %s291 = ssub.s32 %s15, 1
        %p292 = scmp.lt.s32.totalorder %s20, 1
        %s293 = scalar_select %p292, %s20, 1
        %s294 = smul.addr %s293, 8
        %s295 = scalar_lea.vmem %s0, %s294
        %p296 = pneg %p41
        %p297 = pneg %p38
        %p298 = pneg %p62
        %p299 = pneg %p59
        %p300 = scmp.ge.s32.totalorder %s20, 1
        %s301 = scalar_select %p300, 1, 0
        %p302 = scmp.lt.s32.totalorder %s301, 1
        %s303 = scalar_select %p302, %s301, 1
        %s304 = smul.addr %s303, 16
        %s305 = smul.addr %s304, 4
        %s306 = scalar_lea.vmem %s2, %s305
        %p307 = pneg %p92
        %p308 = pneg %p89
        %p309 = scmp.ge.s32.totalorder %s20, 1
        %s310 = scalar_select %p309, 1, 0
        %p311 = scmp.lt.s32.totalorder %s310, 1
        %s312 = scalar_select %p311, %s310, 1
        %s313 = smul.addr %s312, 16
        %s314 = smul.addr %s313, 8
        %s315 = scalar_lea.vmem %s3, %s314
        %p316 = pneg %p122
        %p317 = pneg %p119
        %p318 = scmp.ge.s32.totalorder %s20, 1
        %s319 = scalar_select %p318, 1, 0
        %p320 = scmp.lt.s32.totalorder %s319, 1
        %s321 = scalar_select %p320, %s319, 1
        %s322 = smul.addr %s321, 16
        %s323 = smul.addr %s322, 4
        %s324 = scalar_lea.vmem %s4, %s323
        %p325 = pneg %p152
        %p326 = pneg %p149
        %p327 = scmp.ge.s32.totalorder %s20, 1
        %s328 = scalar_select %p327, 1, 0
        %p329 = scmp.lt.s32.totalorder %s328, 1
        %s330 = scalar_select %p329, %s328, 1
        %s331 = smul.addr %s330, 16
        %s332 = smul.addr %s331, 8
        %s333 = scalar_lea.vmem %s5, %s332
        %p334 = pneg %p182
        %p335 = pneg %p179
        %p336 = pneg %p208
        %p337 = pneg %p205
        %s338 = sand.u32 %s195, 1
        %s339 = scalar_lea.sflag [#allocation3], %s338
        %s340 = sand.u32 %s195, 1
        %s341 = smul.addr %s340, 128
        %s342 = scalar_lea.vmem [#allocation2], %s341
        %p343 = scmp.lt.s32.totalorder %s20, 1
        %s344 = scalar_select %p343, %s20, 1
        %s345 = smul.addr %s344, 8
        %s346 = scalar_lea.vmem %s0, %s345
        %p347 = scmp.ge.s32.totalorder %s20, 1
        %s348 = scalar_select %p347, 1, 0
        %p349 = scmp.lt.s32.totalorder %s348, 1
        %s350 = scalar_select %p349, %s348, 1
        %s351 = smul.addr %s350, 16
        %s352 = smul.addr %s351, 4
        %s353 = scalar_lea.vmem %s2, %s352
        %p354 = scmp.ge.s32.totalorder %s20, 1
        %s355 = scalar_select %p354, 1, 0
        %p356 = scmp.ge.s32.totalorder %s20, 1
        %s357 = scalar_select %p356, 1, 0
        %p358 = scmp.lt.s32.totalorder %s357, 1
        %s359 = scalar_select %p358, %s357, 1
        %s360 = smul.addr %s359, 16
        %s361 = smul.addr %s360, 8
        %s362 = scalar_lea.vmem %s3, %s361
        %p363 = scmp.ge.s32.totalorder %s20, 1
        %s364 = scalar_select %p363, 1, 0
        %p365 = scmp.ge.s32.totalorder %s20, 1
        %s366 = scalar_select %p365, 1, 0
        %p367 = scmp.lt.s32.totalorder %s366, 1
        %s368 = scalar_select %p367, %s366, 1
        %s369 = smul.addr %s368, 16
        %s370 = smul.addr %s369, 4
        %s371 = scalar_lea.vmem %s4, %s370
        %p372 = scmp.ge.s32.totalorder %s20, 1
        %s373 = scalar_select %p372, 1, 0
        %p374 = scmp.ge.s32.totalorder %s20, 1
        %s375 = scalar_select %p374, 1, 0
        %p376 = scmp.lt.s32.totalorder %s375, 1
        %s377 = scalar_select %p376, %s375, 1
        %s378 = smul.addr %s377, 16
        %s379 = smul.addr %s378, 8
        %s380 = scalar_lea.vmem %s5, %s379
        %p381 = scmp.ge.s32.totalorder %s20, 1
        %s382 = scalar_select %p381, 1, 0
        %v384 = vlaneseq
        %v385 = vshrl.u32 %v384, 7
        %v386 = vadd.s32 %v385, 8
        %v387 = vadd.s32 %v385, 16
        %v388 = vadd.s32 %v385, 24
        %v389 = vadd.s32 %v385, 32
        %v390 = vadd.s32 %v385, 40
        %v391 = vadd.s32 %v385, 48
        %v392 = vadd.s32 %v385, 56
        %v393 = vadd.s32 %v385, 64
        %v394 = vadd.s32 %v385, 72
        %v395 = vadd.s32 %v385, 80
        %v396 = vadd.s32 %v385, 88
        %v397 = vadd.s32 %v385, 96
        %v398 = vadd.s32 %v385, 104
        %v399 = vadd.s32 %v385, 112
        %v400 = vadd.s32 %v385, 120
        %v401 = vld [vmem:[%s346] sm:$0x1]
        %v402 = vlaneseq
        %v403 = vshrl.u32 %v402, 7
        %v404 = vsub.s32 0, %v403
        %v405 = vrot.slane %v401, %v404
        %vm406 = vcmp.eq.s32.totalorder %v405, %v385
        %vm407 = vcmp.eq.s32.totalorder %v405, %v386
        %vm408 = vcmp.eq.s32.totalorder %v405, %v387
        %vm409 = vcmp.eq.s32.totalorder %v405, %v388
        %vm410 = vcmp.eq.s32.totalorder %v405, %v389
        %vm411 = vcmp.eq.s32.totalorder %v405, %v390
        %vm412 = vcmp.eq.s32.totalorder %v405, %v391
        %vm413 = vcmp.eq.s32.totalorder %v405, %v392
        %vm414 = vcmp.eq.s32.totalorder %v405, %v393
        %vm415 = vcmp.eq.s32.totalorder %v405, %v394
        %vm416 = vcmp.eq.s32.totalorder %v405, %v395
        %vm417 = vcmp.eq.s32.totalorder %v405, %v396
        %vm418 = vcmp.eq.s32.totalorder %v405, %v397
        %vm419 = vcmp.eq.s32.totalorder %v405, %v398
        %vm420 = vcmp.eq.s32.totalorder %v405, %v399
        %vm421 = vcmp.eq.s32.totalorder %v405, %v400
        %v422 = vsel %vm406, 1, 0
        %v423 = vsel %vm407, 1, 0
        %v424 = vsel %vm408, 1, 0
        %v425 = vsel %vm409, 1, 0
        %v426 = vsel %vm410, 1, 0
        %v427 = vsel %vm411, 1, 0
        %v428 = vsel %vm412, 1, 0
        %v429 = vsel %vm413, 1, 0
        %v430 = vsel %vm414, 1, 0
        %v431 = vsel %vm415, 1, 0
        %v432 = vsel %vm416, 1, 0
        %v433 = vsel %vm417, 1, 0
        %v434 = vsel %vm418, 1, 0
        %v435 = vsel %vm419, 1, 0
        %v436 = vsel %vm420, 1, 0
        %v437 = vsel %vm421, 1, 0
        %v438 = vcvt.s32.f32 %v422
        %v439 = vcvt.s32.f32 %v423
        %v440 = vcvt.s32.f32 %v424
        %v441 = vcvt.s32.f32 %v425
        %v442 = vcvt.s32.f32 %v426
        %v443 = vcvt.s32.f32 %v427
        %v444 = vcvt.s32.f32 %v428
        %v445 = vcvt.s32.f32 %v429
        %v446 = vcvt.s32.f32 %v430
        %v447 = vcvt.s32.f32 %v431
        %v448 = vcvt.s32.f32 %v432
        %v449 = vcvt.s32.f32 %v433
        %v450 = vcvt.s32.f32 %v434
        %v451 = vcvt.s32.f32 %v435
        %v452 = vcvt.s32.f32 %v436
        %v453 = vcvt.s32.f32 %v437
        %v454 = vadd.f32 %v438, 0.0
        %v455 = vadd.f32 %v439, 0.0
        %v456 = vadd.f32 %v440, 0.0
        %v457 = vadd.f32 %v441, 0.0
        %v458 = vadd.f32 %v442, 0.0
        %v459 = vadd.f32 %v443, 0.0
        %v460 = vadd.f32 %v444, 0.0
        %v461 = vadd.f32 %v445, 0.0
        %v462 = vadd.f32 %v446, 0.0
        %v463 = vadd.f32 %v447, 0.0
        %v464 = vadd.f32 %v448, 0.0
        %v465 = vadd.f32 %v449, 0.0
        %v466 = vadd.f32 %v450, 0.0
        %v467 = vadd.f32 %v451, 0.0
        %v468 = vadd.f32 %v452, 0.0
        %v469 = vadd.f32 %v453, 0.0
        %v470 = vld [vmem:[%s346 + $0x1] sm:$0x1]
        %v471 = vlaneseq
        %v472 = vshrl.u32 %v471, 7
        %v473 = vsub.s32 0, %v472
        %v474 = vrot.slane %v470, %v473
        %vm475 = vcmp.eq.s32.totalorder %v474, %v385
        %vm476 = vcmp.eq.s32.totalorder %v474, %v386
        %vm477 = vcmp.eq.s32.totalorder %v474, %v387
        %vm478 = vcmp.eq.s32.totalorder %v474, %v388
        %vm479 = vcmp.eq.s32.totalorder %v474, %v389
        %vm480 = vcmp.eq.s32.totalorder %v474, %v390
        %vm481 = vcmp.eq.s32.totalorder %v474, %v391
        %vm482 = vcmp.eq.s32.totalorder %v474, %v392
        %vm483 = vcmp.eq.s32.totalorder %v474, %v393
        %vm484 = vcmp.eq.s32.totalorder %v474, %v394
        %vm485 = vcmp.eq.s32.totalorder %v474, %v395
        %vm486 = vcmp.eq.s32.totalorder %v474, %v396
        %vm487 = vcmp.eq.s32.totalorder %v474, %v397
        %vm488 = vcmp.eq.s32.totalorder %v474, %v398
        %vm489 = vcmp.eq.s32.totalorder %v474, %v399
        %vm490 = vcmp.eq.s32.totalorder %v474, %v400
        %v491 = vsel %vm475, 1, 0
        %v492 = vsel %vm476, 1, 0
        %v493 = vsel %vm477, 1, 0
        %v494 = vsel %vm478, 1, 0
        %v495 = vsel %vm479, 1, 0
        %v496 = vsel %vm480, 1, 0
        %v497 = vsel %vm481, 1, 0
        %v498 = vsel %vm482, 1, 0
        %v499 = vsel %vm483, 1, 0
        %v500 = vsel %vm484, 1, 0
        %v501 = vsel %vm485, 1, 0
        %v502 = vsel %vm486, 1, 0
        %v503 = vsel %vm487, 1, 0
        %v504 = vsel %vm488, 1, 0
        %v505 = vsel %vm489, 1, 0
        %v506 = vsel %vm490, 1, 0
        %v507 = vcvt.s32.f32 %v491
        %v508 = vcvt.s32.f32 %v492
        %v509 = vcvt.s32.f32 %v493
        %v510 = vcvt.s32.f32 %v494
        %v511 = vcvt.s32.f32 %v495
        %v512 = vcvt.s32.f32 %v496
        %v513 = vcvt.s32.f32 %v497
        %v514 = vcvt.s32.f32 %v498
        %v515 = vcvt.s32.f32 %v499
        %v516 = vcvt.s32.f32 %v500
        %v517 = vcvt.s32.f32 %v501
        %v518 = vcvt.s32.f32 %v502
        %v519 = vcvt.s32.f32 %v503
        %v520 = vcvt.s32.f32 %v504
        %v521 = vcvt.s32.f32 %v505
        %v522 = vcvt.s32.f32 %v506
        %v523 = vadd.f32 %v454, %v507
        %v524 = vadd.f32 %v455, %v508
        %v525 = vadd.f32 %v456, %v509
        %v526 = vadd.f32 %v457, %v510
        %v527 = vadd.f32 %v458, %v511
        %v528 = vadd.f32 %v459, %v512
        %v529 = vadd.f32 %v460, %v513
        %v530 = vadd.f32 %v461, %v514
        %v531 = vadd.f32 %v462, %v515
        %v532 = vadd.f32 %v463, %v516
        %v533 = vadd.f32 %v464, %v517
        %v534 = vadd.f32 %v465, %v518
        %v535 = vadd.f32 %v466, %v519
        %v536 = vadd.f32 %v467, %v520
        %v537 = vadd.f32 %v468, %v521
        %v538 = vadd.f32 %v469, %v522
        %v539 = vld [vmem:[%s346 + $0x2] sm:$0x1]
        %v540 = vlaneseq
        %v541 = vshrl.u32 %v540, 7
        %v542 = vsub.s32 0, %v541
        %v543 = vrot.slane %v539, %v542
        %vm544 = vcmp.eq.s32.totalorder %v543, %v385
        %vm545 = vcmp.eq.s32.totalorder %v543, %v386
        %vm546 = vcmp.eq.s32.totalorder %v543, %v387
        %vm547 = vcmp.eq.s32.totalorder %v543, %v388
        %vm548 = vcmp.eq.s32.totalorder %v543, %v389
        %vm549 = vcmp.eq.s32.totalorder %v543, %v390
        %vm550 = vcmp.eq.s32.totalorder %v543, %v391
        %vm551 = vcmp.eq.s32.totalorder %v543, %v392
        %vm552 = vcmp.eq.s32.totalorder %v543, %v393
        %vm553 = vcmp.eq.s32.totalorder %v543, %v394
        %vm554 = vcmp.eq.s32.totalorder %v543, %v395
        %vm555 = vcmp.eq.s32.totalorder %v543, %v396
        %vm556 = vcmp.eq.s32.totalorder %v543, %v397
        %vm557 = vcmp.eq.s32.totalorder %v543, %v398
        %vm558 = vcmp.eq.s32.totalorder %v543, %v399
        %vm559 = vcmp.eq.s32.totalorder %v543, %v400
        %v560 = vsel %vm544, 1, 0
        %v561 = vsel %vm545, 1, 0
        %v562 = vsel %vm546, 1, 0
        %v563 = vsel %vm547, 1, 0
        %v564 = vsel %vm548, 1, 0
        %v565 = vsel %vm549, 1, 0
        %v566 = vsel %vm550, 1, 0
        %v567 = vsel %vm551, 1, 0
        %v568 = vsel %vm552, 1, 0
        %v569 = vsel %vm553, 1, 0
        %v570 = vsel %vm554, 1, 0
        %v571 = vsel %vm555, 1, 0
        %v572 = vsel %vm556, 1, 0
        %v573 = vsel %vm557, 1, 0
        %v574 = vsel %vm558, 1, 0
        %v575 = vsel %vm559, 1, 0
        %v576 = vcvt.s32.f32 %v560
        %v577 = vcvt.s32.f32 %v561
        %v578 = vcvt.s32.f32 %v562
        %v579 = vcvt.s32.f32 %v563
        %v580 = vcvt.s32.f32 %v564
        %v581 = vcvt.s32.f32 %v565
        %v582 = vcvt.s32.f32 %v566
        %v583 = vcvt.s32.f32 %v567
        %v584 = vcvt.s32.f32 %v568
        %v585 = vcvt.s32.f32 %v569
        %v586 = vcvt.s32.f32 %v570
        %v587 = vcvt.s32.f32 %v571
        %v588 = vcvt.s32.f32 %v572
        %v589 = vcvt.s32.f32 %v573
        %v590 = vcvt.s32.f32 %v574
        %v591 = vcvt.s32.f32 %v575
        %v592 = vadd.f32 %v523, %v576
        %v593 = vadd.f32 %v524, %v577
        %v594 = vadd.f32 %v525, %v578
        %v595 = vadd.f32 %v526, %v579
        %v596 = vadd.f32 %v527, %v580
        %v597 = vadd.f32 %v528, %v581
        %v598 = vadd.f32 %v529, %v582
        %v599 = vadd.f32 %v530, %v583
        %v600 = vadd.f32 %v531, %v584
        %v601 = vadd.f32 %v532, %v585
        %v602 = vadd.f32 %v533, %v586
        %v603 = vadd.f32 %v534, %v587
        %v604 = vadd.f32 %v535, %v588
        %v605 = vadd.f32 %v536, %v589
        %v606 = vadd.f32 %v537, %v590
        %v607 = vadd.f32 %v538, %v591
        %v608 = vld [vmem:[%s346 + $0x3] sm:$0x1]
        %v609 = vlaneseq
        %v610 = vshrl.u32 %v609, 7
        %v611 = vsub.s32 0, %v610
        %v612 = vrot.slane %v608, %v611
        %vm613 = vcmp.eq.s32.totalorder %v612, %v385
        %vm614 = vcmp.eq.s32.totalorder %v612, %v386
        %vm615 = vcmp.eq.s32.totalorder %v612, %v387
        %vm616 = vcmp.eq.s32.totalorder %v612, %v388
        %vm617 = vcmp.eq.s32.totalorder %v612, %v389
        %vm618 = vcmp.eq.s32.totalorder %v612, %v390
        %vm619 = vcmp.eq.s32.totalorder %v612, %v391
        %vm620 = vcmp.eq.s32.totalorder %v612, %v392
        %vm621 = vcmp.eq.s32.totalorder %v612, %v393
        %vm622 = vcmp.eq.s32.totalorder %v612, %v394
        %vm623 = vcmp.eq.s32.totalorder %v612, %v395
        %vm624 = vcmp.eq.s32.totalorder %v612, %v396
        %vm625 = vcmp.eq.s32.totalorder %v612, %v397
        %vm626 = vcmp.eq.s32.totalorder %v612, %v398
        %vm627 = vcmp.eq.s32.totalorder %v612, %v399
        %vm628 = vcmp.eq.s32.totalorder %v612, %v400
        %v629 = vsel %vm613, 1, 0
        %v630 = vsel %vm614, 1, 0
        %v631 = vsel %vm615, 1, 0
        %v632 = vsel %vm616, 1, 0
        %v633 = vsel %vm617, 1, 0
        %v634 = vsel %vm618, 1, 0
        %v635 = vsel %vm619, 1, 0
        %v636 = vsel %vm620, 1, 0
        %v637 = vsel %vm621, 1, 0
        %v638 = vsel %vm622, 1, 0
        %v639 = vsel %vm623, 1, 0
        %v640 = vsel %vm624, 1, 0
        %v641 = vsel %vm625, 1, 0
        %v642 = vsel %vm626, 1, 0
        %v643 = vsel %vm627, 1, 0
        %v644 = vsel %vm628, 1, 0
        %v645 = vcvt.s32.f32 %v629
        %v646 = vcvt.s32.f32 %v630
        %v647 = vcvt.s32.f32 %v631
        %v648 = vcvt.s32.f32 %v632
        %v649 = vcvt.s32.f32 %v633
        %v650 = vcvt.s32.f32 %v634
        %v651 = vcvt.s32.f32 %v635
        %v652 = vcvt.s32.f32 %v636
        %v653 = vcvt.s32.f32 %v637
        %v654 = vcvt.s32.f32 %v638
        %v655 = vcvt.s32.f32 %v639
        %v656 = vcvt.s32.f32 %v640
        %v657 = vcvt.s32.f32 %v641
        %v658 = vcvt.s32.f32 %v642
        %v659 = vcvt.s32.f32 %v643
        %v660 = vcvt.s32.f32 %v644
        %v661 = vadd.f32 %v592, %v645
        %v662 = vadd.f32 %v593, %v646
        %v663 = vadd.f32 %v594, %v647
        %v664 = vadd.f32 %v595, %v648
        %v665 = vadd.f32 %v596, %v649
        %v666 = vadd.f32 %v597, %v650
        %v667 = vadd.f32 %v598, %v651
        %v668 = vadd.f32 %v599, %v652
        %v669 = vadd.f32 %v600, %v653
        %v670 = vadd.f32 %v601, %v654
        %v671 = vadd.f32 %v602, %v655
        %v672 = vadd.f32 %v603, %v656
        %v673 = vadd.f32 %v604, %v657
        %v674 = vadd.f32 %v605, %v658
        %v675 = vadd.f32 %v606, %v659
        %v676 = vadd.f32 %v607, %v660
        %v677 = vld [vmem:[%s346 + $0x4] sm:$0x1]
        %v678 = vlaneseq
        %v679 = vshrl.u32 %v678, 7
        %v680 = vsub.s32 0, %v679
        %v681 = vrot.slane %v677, %v680
        %vm682 = vcmp.eq.s32.totalorder %v681, %v385
        %vm683 = vcmp.eq.s32.totalorder %v681, %v386
        %vm684 = vcmp.eq.s32.totalorder %v681, %v387
        %vm685 = vcmp.eq.s32.totalorder %v681, %v388
        %vm686 = vcmp.eq.s32.totalorder %v681, %v389
        %vm687 = vcmp.eq.s32.totalorder %v681, %v390
        %vm688 = vcmp.eq.s32.totalorder %v681, %v391
        %vm689 = vcmp.eq.s32.totalorder %v681, %v392
        %vm690 = vcmp.eq.s32.totalorder %v681, %v393
        %vm691 = vcmp.eq.s32.totalorder %v681, %v394
        %vm692 = vcmp.eq.s32.totalorder %v681, %v395
        %vm693 = vcmp.eq.s32.totalorder %v681, %v396
        %vm694 = vcmp.eq.s32.totalorder %v681, %v397
        %vm695 = vcmp.eq.s32.totalorder %v681, %v398
        %vm696 = vcmp.eq.s32.totalorder %v681, %v399
        %vm697 = vcmp.eq.s32.totalorder %v681, %v400
        %v698 = vsel %vm682, 1, 0
        %v699 = vsel %vm683, 1, 0
        %v700 = vsel %vm684, 1, 0
        %v701 = vsel %vm685, 1, 0
        %v702 = vsel %vm686, 1, 0
        %v703 = vsel %vm687, 1, 0
        %v704 = vsel %vm688, 1, 0
        %v705 = vsel %vm689, 1, 0
        %v706 = vsel %vm690, 1, 0
        %v707 = vsel %vm691, 1, 0
        %v708 = vsel %vm692, 1, 0
        %v709 = vsel %vm693, 1, 0
        %v710 = vsel %vm694, 1, 0
        %v711 = vsel %vm695, 1, 0
        %v712 = vsel %vm696, 1, 0
        %v713 = vsel %vm697, 1, 0
        %v714 = vcvt.s32.f32 %v698
        %v715 = vcvt.s32.f32 %v699
        %v716 = vcvt.s32.f32 %v700
        %v717 = vcvt.s32.f32 %v701
        %v718 = vcvt.s32.f32 %v702
        %v719 = vcvt.s32.f32 %v703
        %v720 = vcvt.s32.f32 %v704
        %v721 = vcvt.s32.f32 %v705
        %v722 = vcvt.s32.f32 %v706
        %v723 = vcvt.s32.f32 %v707
        %v724 = vcvt.s32.f32 %v708
        %v725 = vcvt.s32.f32 %v709
        %v726 = vcvt.s32.f32 %v710
        %v727 = vcvt.s32.f32 %v711
        %v728 = vcvt.s32.f32 %v712
        %v729 = vcvt.s32.f32 %v713
        %v730 = vadd.f32 %v661, %v714
        %v731 = vadd.f32 %v662, %v715
        %v732 = vadd.f32 %v663, %v716
        %v733 = vadd.f32 %v664, %v717
        %v734 = vadd.f32 %v665, %v718
        %v735 = vadd.f32 %v666, %v719
        %v736 = vadd.f32 %v667, %v720
        %v737 = vadd.f32 %v668, %v721
        %v738 = vadd.f32 %v669, %v722
        %v739 = vadd.f32 %v670, %v723
        %v740 = vadd.f32 %v671, %v724
        %v741 = vadd.f32 %v672, %v725
        %v742 = vadd.f32 %v673, %v726
        %v743 = vadd.f32 %v674, %v727
        %v744 = vadd.f32 %v675, %v728
        %v745 = vadd.f32 %v676, %v729
        %v746 = vld [vmem:[%s346 + $0x5] sm:$0x1]
        %v747 = vlaneseq
        %v748 = vshrl.u32 %v747, 7
        %v749 = vsub.s32 0, %v748
        %v750 = vrot.slane %v746, %v749
        %vm751 = vcmp.eq.s32.totalorder %v750, %v385
        %vm752 = vcmp.eq.s32.totalorder %v750, %v386
        %vm753 = vcmp.eq.s32.totalorder %v750, %v387
        %vm754 = vcmp.eq.s32.totalorder %v750, %v388
        %vm755 = vcmp.eq.s32.totalorder %v750, %v389
        %vm756 = vcmp.eq.s32.totalorder %v750, %v390
        %vm757 = vcmp.eq.s32.totalorder %v750, %v391
        %vm758 = vcmp.eq.s32.totalorder %v750, %v392
        %vm759 = vcmp.eq.s32.totalorder %v750, %v393
        %vm760 = vcmp.eq.s32.totalorder %v750, %v394
        %vm761 = vcmp.eq.s32.totalorder %v750, %v395
        %vm762 = vcmp.eq.s32.totalorder %v750, %v396
        %vm763 = vcmp.eq.s32.totalorder %v750, %v397
        %vm764 = vcmp.eq.s32.totalorder %v750, %v398
        %vm765 = vcmp.eq.s32.totalorder %v750, %v399
        %vm766 = vcmp.eq.s32.totalorder %v750, %v400
        %v767 = vsel %vm751, 1, 0
        %v768 = vsel %vm752, 1, 0
        %v769 = vsel %vm753, 1, 0
        %v770 = vsel %vm754, 1, 0
        %v771 = vsel %vm755, 1, 0
        %v772 = vsel %vm756, 1, 0
        %v773 = vsel %vm757, 1, 0
        %v774 = vsel %vm758, 1, 0
        %v775 = vsel %vm759, 1, 0
        %v776 = vsel %vm760, 1, 0
        %v777 = vsel %vm761, 1, 0
        %v778 = vsel %vm762, 1, 0
        %v779 = vsel %vm763, 1, 0
        %v780 = vsel %vm764, 1, 0
        %v781 = vsel %vm765, 1, 0
        %v782 = vsel %vm766, 1, 0
        %v783 = vcvt.s32.f32 %v767
        %v784 = vcvt.s32.f32 %v768
        %v785 = vcvt.s32.f32 %v769
        %v786 = vcvt.s32.f32 %v770
        %v787 = vcvt.s32.f32 %v771
        %v788 = vcvt.s32.f32 %v772
        %v789 = vcvt.s32.f32 %v773
        %v790 = vcvt.s32.f32 %v774
        %v791 = vcvt.s32.f32 %v775
        %v792 = vcvt.s32.f32 %v776
        %v793 = vcvt.s32.f32 %v777
        %v794 = vcvt.s32.f32 %v778
        %v795 = vcvt.s32.f32 %v779
        %v796 = vcvt.s32.f32 %v780
        %v797 = vcvt.s32.f32 %v781
        %v798 = vcvt.s32.f32 %v782
        %v799 = vadd.f32 %v730, %v783
        %v800 = vadd.f32 %v731, %v784
        %v801 = vadd.f32 %v732, %v785
        %v802 = vadd.f32 %v733, %v786
        %v803 = vadd.f32 %v734, %v787
        %v804 = vadd.f32 %v735, %v788
        %v805 = vadd.f32 %v736, %v789
        %v806 = vadd.f32 %v737, %v790
        %v807 = vadd.f32 %v738, %v791
        %v808 = vadd.f32 %v739, %v792
        %v809 = vadd.f32 %v740, %v793
        %v810 = vadd.f32 %v741, %v794
        %v811 = vadd.f32 %v742, %v795
        %v812 = vadd.f32 %v743, %v796
        %v813 = vadd.f32 %v744, %v797
        %v814 = vadd.f32 %v745, %v798
        %v815 = vld [vmem:[%s346 + $0x6] sm:$0x1]
        %v816 = vlaneseq
        %v817 = vshrl.u32 %v816, 7
        %v818 = vsub.s32 0, %v817
        %v819 = vrot.slane %v815, %v818
        %vm820 = vcmp.eq.s32.totalorder %v819, %v385
        %vm821 = vcmp.eq.s32.totalorder %v819, %v386
        %vm822 = vcmp.eq.s32.totalorder %v819, %v387
        %vm823 = vcmp.eq.s32.totalorder %v819, %v388
        %vm824 = vcmp.eq.s32.totalorder %v819, %v389
        %vm825 = vcmp.eq.s32.totalorder %v819, %v390
        %vm826 = vcmp.eq.s32.totalorder %v819, %v391
        %vm827 = vcmp.eq.s32.totalorder %v819, %v392
        %vm828 = vcmp.eq.s32.totalorder %v819, %v393
        %vm829 = vcmp.eq.s32.totalorder %v819, %v394
        %vm830 = vcmp.eq.s32.totalorder %v819, %v395
        %vm831 = vcmp.eq.s32.totalorder %v819, %v396
        %vm832 = vcmp.eq.s32.totalorder %v819, %v397
        %vm833 = vcmp.eq.s32.totalorder %v819, %v398
        %vm834 = vcmp.eq.s32.totalorder %v819, %v399
        %vm835 = vcmp.eq.s32.totalorder %v819, %v400
        %v836 = vsel %vm820, 1, 0
        %v837 = vsel %vm821, 1, 0
        %v838 = vsel %vm822, 1, 0
        %v839 = vsel %vm823, 1, 0
        %v840 = vsel %vm824, 1, 0
        %v841 = vsel %vm825, 1, 0
        %v842 = vsel %vm826, 1, 0
        %v843 = vsel %vm827, 1, 0
        %v844 = vsel %vm828, 1, 0
        %v845 = vsel %vm829, 1, 0
        %v846 = vsel %vm830, 1, 0
        %v847 = vsel %vm831, 1, 0
        %v848 = vsel %vm832, 1, 0
        %v849 = vsel %vm833, 1, 0
        %v850 = vsel %vm834, 1, 0
        %v851 = vsel %vm835, 1, 0
        %v852 = vcvt.s32.f32 %v836
        %v853 = vcvt.s32.f32 %v837
        %v854 = vcvt.s32.f32 %v838
        %v855 = vcvt.s32.f32 %v839
        %v856 = vcvt.s32.f32 %v840
        %v857 = vcvt.s32.f32 %v841
        %v858 = vcvt.s32.f32 %v842
        %v859 = vcvt.s32.f32 %v843
        %v860 = vcvt.s32.f32 %v844
        %v861 = vcvt.s32.f32 %v845
        %v862 = vcvt.s32.f32 %v846
        %v863 = vcvt.s32.f32 %v847
        %v864 = vcvt.s32.f32 %v848
        %v865 = vcvt.s32.f32 %v849
        %v866 = vcvt.s32.f32 %v850
        %v867 = vcvt.s32.f32 %v851
        %v868 = vadd.f32 %v799, %v852
        %v869 = vadd.f32 %v800, %v853
        %v870 = vadd.f32 %v801, %v854
        %v871 = vadd.f32 %v802, %v855
        %v872 = vadd.f32 %v803, %v856
        %v873 = vadd.f32 %v804, %v857
        %v874 = vadd.f32 %v805, %v858
        %v875 = vadd.f32 %v806, %v859
        %v876 = vadd.f32 %v807, %v860
        %v877 = vadd.f32 %v808, %v861
        %v878 = vadd.f32 %v809, %v862
        %v879 = vadd.f32 %v810, %v863
        %v880 = vadd.f32 %v811, %v864
        %v881 = vadd.f32 %v812, %v865
        %v882 = vadd.f32 %v813, %v866
        %v883 = vadd.f32 %v814, %v867
        %v884 = vld [vmem:[%s346 + $0x7] sm:$0x1]
        %v885 = vlaneseq
        %v886 = vshrl.u32 %v885, 7
        %v887 = vsub.s32 0, %v886
        %v888 = vrot.slane %v884, %v887
        %vm889 = vcmp.eq.s32.totalorder %v888, %v385
        %vm890 = vcmp.eq.s32.totalorder %v888, %v386
        %vm891 = vcmp.eq.s32.totalorder %v888, %v387
        %vm892 = vcmp.eq.s32.totalorder %v888, %v388
        %vm893 = vcmp.eq.s32.totalorder %v888, %v389
        %vm894 = vcmp.eq.s32.totalorder %v888, %v390
        %vm895 = vcmp.eq.s32.totalorder %v888, %v391
        %vm896 = vcmp.eq.s32.totalorder %v888, %v392
        %vm897 = vcmp.eq.s32.totalorder %v888, %v393
        %vm898 = vcmp.eq.s32.totalorder %v888, %v394
        %vm899 = vcmp.eq.s32.totalorder %v888, %v395
        %vm900 = vcmp.eq.s32.totalorder %v888, %v396
        %vm901 = vcmp.eq.s32.totalorder %v888, %v397
        %vm902 = vcmp.eq.s32.totalorder %v888, %v398
        %vm903 = vcmp.eq.s32.totalorder %v888, %v399
        %vm904 = vcmp.eq.s32.totalorder %v888, %v400
        %v905 = vsel %vm889, 1, 0
        %v906 = vsel %vm890, 1, 0
        %v907 = vsel %vm891, 1, 0
        %v908 = vsel %vm892, 1, 0
        %v909 = vsel %vm893, 1, 0
        %v910 = vsel %vm894, 1, 0
        %v911 = vsel %vm895, 1, 0
        %v912 = vsel %vm896, 1, 0
        %v913 = vsel %vm897, 1, 0
        %v914 = vsel %vm898, 1, 0
        %v915 = vsel %vm899, 1, 0
        %v916 = vsel %vm900, 1, 0
        %v917 = vsel %vm901, 1, 0
        %v918 = vsel %vm902, 1, 0
        %v919 = vsel %vm903, 1, 0
        %v920 = vsel %vm904, 1, 0
        %v921 = vcvt.s32.f32 %v905
        %v922 = vcvt.s32.f32 %v906
        %v923 = vcvt.s32.f32 %v907
        %v924 = vcvt.s32.f32 %v908
        %v925 = vcvt.s32.f32 %v909
        %v926 = vcvt.s32.f32 %v910
        %v927 = vcvt.s32.f32 %v911
        %v928 = vcvt.s32.f32 %v912
        %v929 = vcvt.s32.f32 %v913
        %v930 = vcvt.s32.f32 %v914
        %v931 = vcvt.s32.f32 %v915
        %v932 = vcvt.s32.f32 %v916
        %v933 = vcvt.s32.f32 %v917
        %v934 = vcvt.s32.f32 %v918
        %v935 = vcvt.s32.f32 %v919
        %v936 = vcvt.s32.f32 %v920
        %v937 = vadd.f32 %v868, %v921
        %v938 = vadd.f32 %v869, %v922
        %v939 = vadd.f32 %v870, %v923
        %v940 = vadd.f32 %v871, %v924
        %v941 = vadd.f32 %v872, %v925
        %v942 = vadd.f32 %v873, %v926
        %v943 = vadd.f32 %v874, %v927
        %v944 = vadd.f32 %v875, %v928
        %v945 = vadd.f32 %v876, %v929
        %v946 = vadd.f32 %v877, %v930
        %v947 = vadd.f32 %v878, %v931
        %v948 = vadd.f32 %v879, %v932
        %v949 = vadd.f32 %v880, %v933
        %v950 = vadd.f32 %v881, %v934
        %v951 = vadd.f32 %v882, %v935
        %v952 = vadd.f32 %v883, %v936
        %v953 = vsub.f32 8.0, %v937
        %v954 = vmax.f32 %v953, 1e-08
        %v955 = vrcp.pop %v954
        %v956 = vld [vmem:[%s1] sm:$0xf]
        %v957 = vld [vmem:[%s1 + $0x4] sm:$0xf]
        %v958 = vld [vmem:[%s1 + $0x8] sm:$0xf]
        %v959 = vld [vmem:[%s1 + $0xc] sm:$0xf]
        %v960 = vld [vmem:[%s1 + $0x10] sm:$0xf]
        %v961 = vld [vmem:[%s1 + $0x14] sm:$0xf]
        %v962 = vld [vmem:[%s1 + $0x18] sm:$0xf]
        %v963 = vld [vmem:[%s1 + $0x1c] sm:$0xf]
        %v964 = vld [vmem:[%s1 + $0x20] sm:$0xf]
        %v965 = vld [vmem:[%s1 + $0x24] sm:$0xf]
        %v966 = vld [vmem:[%s1 + $0x28] sm:$0xf]
        %v967 = vld [vmem:[%s1 + $0x2c] sm:$0xf]
        %v968 = vld [vmem:[%s1 + $0x30] sm:$0xf]
        %v969 = vld [vmem:[%s1 + $0x34] sm:$0xf]
        %v970 = vld [vmem:[%s1 + $0x38] sm:$0xf]
        %v971 = vld [vmem:[%s1 + $0x3c] sm:$0xf]
        %v972 = vpack.c.bf16 %v938, %v937
        %v973 = vpack.c.bf16 %v940, %v939
        %v974 = vpack.c.bf16 %v942, %v941
        %v975 = vpack.c.bf16 %v944, %v943
        %v976 = vpack.c.bf16 %v946, %v945
        %v977 = vpack.c.bf16 %v948, %v947
        %v978 = vpack.c.bf16 %v950, %v949
        %v979 = vpack.c.bf16 %v952, %v951
        %v996 = vunpack.c.l.b16 %v956
        %v997 = vunpack.c.l.b16 %v957
        %v998 = vunpack.c.l.b16 %v958
        %v999 = vunpack.c.l.b16 %v959
        %v1000 = vunpack.c.l.b16 %v960
        %v1001 = vunpack.c.l.b16 %v961
        %v1002 = vunpack.c.l.b16 %v962
        %v1003 = vunpack.c.l.b16 %v963
        %v1004 = vunpack.c.l.b16 %v964
        %v1005 = vunpack.c.l.b16 %v965
        %v1006 = vunpack.c.l.b16 %v966
        %v1007 = vunpack.c.l.b16 %v967
        %v1008 = vunpack.c.l.b16 %v968
        %v1009 = vunpack.c.l.b16 %v969
        %v1010 = vunpack.c.l.b16 %v970
        %v1011 = vunpack.c.l.b16 %v971
        %v1012 = vpack.c.b16 %v997, %v996
        %v1013 = vpack.c.b16 %v999, %v998
        %v1014 = vpack.c.b16 %v1001, %v1000
        %v1015 = vpack.c.b16 %v1003, %v1002
        %v1016 = vpack.c.b16 %v1005, %v1004
        %v1017 = vpack.c.b16 %v1007, %v1006
        %v1018 = vpack.c.b16 %v1009, %v1008
        %v1019 = vpack.c.b16 %v1011, %v1010
        %1028 = vmatprep.subr.bf16.mxu0 0
        %1029 = vmatpush1.bf16.msra.mxu0 %v972
        %1030 = vmatprep.subr.bf16.mxu0 0
        %1031 = vmatpush1.bf16.msra.mxu0 %v973
        %1032 = vmatprep.subr.bf16.mxu0 0
        %1033 = vmatpush1.bf16.msra.mxu0 %v974
        %1034 = vmatprep.subr.bf16.mxu0 0
        %1035 = vmatpush1.bf16.msra.mxu0 %v975
        %1036 = vmatprep.subr.bf16.mxu0 0
        %1037 = vmatpush1.bf16.msra.mxu0 %v976
        %1038 = vmatprep.subr.bf16.mxu0 0
        %1039 = vmatpush1.bf16.msra.mxu0 %v977
        %1040 = vmatprep.subr.bf16.mxu0 0
        %1041 = vmatpush1.bf16.msra.mxu0 %v978
        %1042 = vmatprep.subr.bf16.mxu0 0
        %1043 = vmatpush1.bf16.msra.mxu0 %v979
        %1044 = vmatprep.subr.bf16.mxu0 0
        %1045 = vmatpush1.bf16.msra.mxu0 0
        %1046 = vmatprep.subr.bf16.mxu0 0
        %1047 = vmatpush1.bf16.msra.mxu0 0
        %1048 = vmatprep.subr.bf16.mxu0 0
        %1049 = vmatpush1.bf16.msra.mxu0 0
        %1050 = vmatprep.subr.bf16.mxu0 0
        %1051 = vmatpush1.bf16.msra.mxu0 0
        %1052 = vmatprep.subr.bf16.mxu0 0
        %1053 = vmatpush1.bf16.msra.mxu0 0
        %1054 = vmatprep.subr.bf16.mxu0 0
        %1055 = vmatpush1.bf16.msra.mxu0 0
        %1056 = vmatprep.subr.bf16.mxu0 0
        %1057 = vmatpush1.bf16.msra.mxu0 0
        %1058 = vmatprep.subr.bf16.mxu0 0
        %1059 = vmatpush1.bf16.msra.mxu0 0
        %1060 = vmatprep.mubr.bf16.mxu0 0
        %1061 = vmatmul.mubr.bf16.gmra.mrb[0].mxu0 %v1012
        %v1062 = vpop.f32.mrb[0].mxu0
        %v1063 = vadd.f32 0.0, %v1062
        %v1064 = vpop.f32.mrb[0].mxu0
        %v1065 = vpop.f32.mrb[0].mxu0
        %v1066 = vadd.f32 0.0, %v1065
        %v1067 = vpop.f32.mrb[0].mxu0
        %1068 = vmatprep.mubr.bf16.mxu0 0
        %1069 = vmatmul.mubr.bf16.gmra.mrb[0].mxu0 %v1013
        %v1070 = vpop.f32.mrb[0].mxu0
        %v1071 = vadd.f32 0.0, %v1070
        %v1072 = vpop.f32.mrb[0].mxu0
        %v1073 = vpop.f32.mrb[0].mxu0
        %v1074 = vadd.f32 0.0, %v1073
        %v1075 = vpop.f32.mrb[0].mxu0
        %1076 = vmatprep.mubr.bf16.mxu0 0
        %1077 = vmatmul.mubr.bf16.gmra.mrb[0].mxu0 %v1014
        %v1078 = vpop.f32.mrb[0].mxu0
        %v1079 = vadd.f32 0.0, %v1078
        %v1080 = vpop.f32.mrb[0].mxu0
        %v1081 = vpop.f32.mrb[0].mxu0
        %v1082 = vadd.f32 0.0, %v1081
        %v1083 = vpop.f32.mrb[0].mxu0
        %1084 = vmatprep.mubr.bf16.mxu0 0
        %1085 = vmatmul.mubr.bf16.gmra.mrb[0].mxu0 %v1015
        %v1086 = vpop.f32.mrb[0].mxu0
        %v1087 = vadd.f32 0.0, %v1086
        %v1088 = vpop.f32.mrb[0].mxu0
        %v1089 = vpop.f32.mrb[0].mxu0
        %v1090 = vadd.f32 0.0, %v1089
        %v1091 = vpop.f32.mrb[0].mxu0
        %1092 = vmatprep.mubr.bf16.mxu0 0
        %1093 = vmatmul.mubr.bf16.gmra.mrb[0].mxu0 %v1016
        %v1094 = vpop.f32.mrb[0].mxu0
        %v1095 = vadd.f32 0.0, %v1094
        %v1096 = vpop.f32.mrb[0].mxu0
        %v1097 = vpop.f32.mrb[0].mxu0
        %v1098 = vadd.f32 0.0, %v1097
        %v1099 = vpop.f32.mrb[0].mxu0
        %1100 = vmatprep.mubr.bf16.mxu0 0
        %1101 = vmatmul.mubr.bf16.gmra.mrb[0].mxu0 %v1017
        %v1102 = vpop.f32.mrb[0].mxu0
        %v1103 = vadd.f32 0.0, %v1102
        %v1104 = vpop.f32.mrb[0].mxu0
        %v1105 = vpop.f32.mrb[0].mxu0
        %v1106 = vadd.f32 0.0, %v1105
        %v1107 = vpop.f32.mrb[0].mxu0
        %1108 = vmatprep.mubr.bf16.mxu0 0
        %1109 = vmatmul.mubr.bf16.gmra.mrb[0].mxu0 %v1018
        %v1110 = vpop.f32.mrb[0].mxu0
        %v1111 = vadd.f32 0.0, %v1110
        %v1112 = vpop.f32.mrb[0].mxu0
        %v1113 = vpop.f32.mrb[0].mxu0
        %v1114 = vadd.f32 0.0, %v1113
        %v1115 = vpop.f32.mrb[0].mxu0
        %1116 = vmatprep.mubr.bf16.mxu0 0
        %1117 = vmatmul.mubr.bf16.gmra.mrb[0].mxu0 %v1019
        %v1118 = vpop.f32.mrb[0].mxu0
        %v1119 = vadd.f32 0.0, %v1118
        %v1120 = vpop.f32.mrb[0].mxu0
        %v1121 = vpop.f32.mrb[0].mxu0
        %v1122 = vadd.f32 0.0, %v1121
        %v1123 = vpop.f32.mrb[0].mxu0
        %1124 = vdwg.mxu0
        %v1125 = vlaneseq
        %v1126 = vshrl.u32 %v1125, 7
        %v1127 = vsub.s32 0, %v1126
        %v1128 = vrot.slane %v955, %v1127
        %v1129 = vmul.f32 %v1063, %v1128
        %v1130 = vmul.f32 %v1066, %v1128
        %v1131 = vmul.f32 %v1071, %v1128
        %v1132 = vmul.f32 %v1074, %v1128
        %v1133 = vmul.f32 %v1079, %v1128
        %v1134 = vmul.f32 %v1082, %v1128
        %v1135 = vmul.f32 %v1087, %v1128
        %v1136 = vmul.f32 %v1090, %v1128
        %v1137 = vmul.f32 %v1095, %v1128
        %v1138 = vmul.f32 %v1098, %v1128
        %v1139 = vmul.f32 %v1103, %v1128
        %v1140 = vmul.f32 %v1106, %v1128
        %v1141 = vmul.f32 %v1111, %v1128
        %v1142 = vmul.f32 %v1114, %v1128
        %v1143 = vmul.f32 %v1119, %v1128
        %v1144 = vmul.f32 %v1122, %v1128
        %v1145 = vld [vmem:[%s353] sm:$0xf]
        %v1146 = vld [vmem:[%s353 + $0x4] sm:$0xf]
        %v1147 = vld [vmem:[%s353 + $0x8] sm:$0xf]
        %v1148 = vld [vmem:[%s353 + $0xc] sm:$0xf]
        %v1149 = vld [vmem:[%s353 + $0x10] sm:$0xf]
        %v1150 = vld [vmem:[%s353 + $0x14] sm:$0xf]
        %v1151 = vld [vmem:[%s353 + $0x18] sm:$0xf]
        %v1152 = vld [vmem:[%s353 + $0x1c] sm:$0xf]
        %v1153 = vld [vmem:[%s353 + $0x20] sm:$0xf]
        %v1154 = vld [vmem:[%s353 + $0x24] sm:$0xf]
        %v1155 = vld [vmem:[%s353 + $0x28] sm:$0xf]
        %v1156 = vld [vmem:[%s353 + $0x2c] sm:$0xf]
        %v1157 = vld [vmem:[%s353 + $0x30] sm:$0xf]
        %v1158 = vld [vmem:[%s353 + $0x34] sm:$0xf]
        %v1159 = vld [vmem:[%s353 + $0x38] sm:$0xf]
        %v1160 = vld [vmem:[%s353 + $0x3c] sm:$0xf]
        %v1161 = vld [vmem:[%s362] sm:$0xff]
        %v1162 = vld [vmem:[%s362 + $0x8] sm:$0xff]
        %v1163 = vld [vmem:[%s362 + $0x10] sm:$0xff]
        %v1164 = vld [vmem:[%s362 + $0x18] sm:$0xff]
        %v1165 = vld [vmem:[%s362 + $0x20] sm:$0xff]
        %v1166 = vld [vmem:[%s362 + $0x28] sm:$0xff]
        %v1167 = vld [vmem:[%s362 + $0x30] sm:$0xff]
        %v1168 = vld [vmem:[%s362 + $0x38] sm:$0xff]
        %v1169 = vld [vmem:[%s362 + $0x40] sm:$0xff]
        %v1170 = vld [vmem:[%s362 + $0x48] sm:$0xff]
        %v1171 = vld [vmem:[%s362 + $0x50] sm:$0xff]
        %v1172 = vld [vmem:[%s362 + $0x58] sm:$0xff]
        %v1173 = vld [vmem:[%s362 + $0x60] sm:$0xff]
        %v1174 = vld [vmem:[%s362 + $0x68] sm:$0xff]
        %v1175 = vld [vmem:[%s362 + $0x70] sm:$0xff]
        %v1176 = vld [vmem:[%s362 + $0x78] sm:$0xff]
        %v1177 = vpack.c.bf16 %v1130, %v1129
        %v1178 = vpack.c.bf16 %v1132, %v1131
        %v1179 = vpack.c.bf16 %v1134, %v1133
        %v1180 = vpack.c.bf16 %v1136, %v1135
        %v1181 = vpack.c.bf16 %v1138, %v1137
        %v1182 = vpack.c.bf16 %v1140, %v1139
        %v1183 = vpack.c.bf16 %v1142, %v1141
        %v1184 = vpack.c.bf16 %v1144, %v1143
        %1186 = vset.pattern.permute.xlu0 0
        %1187 = vperm.xlu0 %1186, %v1161
        %v1188 = vpop.permute.xlu0 %1187
        %1191 = vset.pattern.permute.xlu0 0
        %1192 = vperm.xlu0 %1191, %v1162
        %v1193 = vpop.permute.xlu0 %1192
        %1196 = vset.pattern.permute.xlu0 0
        %1197 = vperm.xlu0 %1196, %v1163
        %v1198 = vpop.permute.xlu0 %1197
        %1201 = vset.pattern.permute.xlu0 0
        %1202 = vperm.xlu0 %1201, %v1164
        %v1203 = vpop.permute.xlu0 %1202
        %1206 = vset.pattern.permute.xlu0 0
        %1207 = vperm.xlu0 %1206, %v1165
        %v1208 = vpop.permute.xlu0 %1207
        %1211 = vset.pattern.permute.xlu0 0
        %1212 = vperm.xlu0 %1211, %v1166
        %v1213 = vpop.permute.xlu0 %1212
        %1216 = vset.pattern.permute.xlu0 0
        %1217 = vperm.xlu0 %1216, %v1167
        %v1218 = vpop.permute.xlu0 %1217
        %1221 = vset.pattern.permute.xlu0 0
        %1222 = vperm.xlu0 %1221, %v1168
        %v1223 = vpop.permute.xlu0 %1222
        %1226 = vset.pattern.permute.xlu0 0
        %1227 = vperm.xlu0 %1226, %v1169
        %v1228 = vpop.permute.xlu0 %1227
        %1231 = vset.pattern.permute.xlu0 0
        %1232 = vperm.xlu0 %1231, %v1170
        %v1233 = vpop.permute.xlu0 %1232
        %1236 = vset.pattern.permute.xlu0 0
        %1237 = vperm.xlu0 %1236, %v1171
        %v1238 = vpop.permute.xlu0 %1237
        %1241 = vset.pattern.permute.xlu0 0
        %1242 = vperm.xlu0 %1241, %v1172
        %v1243 = vpop.permute.xlu0 %1242
        %1246 = vset.pattern.permute.xlu0 0
        %1247 = vperm.xlu0 %1246, %v1173
        %v1248 = vpop.permute.xlu0 %1247
        %1251 = vset.pattern.permute.xlu0 0
        %1252 = vperm.xlu0 %1251, %v1174
        %v1253 = vpop.permute.xlu0 %1252
        %1256 = vset.pattern.permute.xlu0 0
        %1257 = vperm.xlu0 %1256, %v1175
        %v1258 = vpop.permute.xlu0 %1257
        %1261 = vset.pattern.permute.xlu0 0
        %1262 = vperm.xlu0 %1261, %v1176
        %v1263 = vpop.permute.xlu0 %1262
        %v1281 = vunpack.c.l.b16 %v1145
        %v1282 = vunpack.c.l.b16 %v1146
        %v1283 = vunpack.c.l.b16 %v1147
        %v1284 = vunpack.c.l.b16 %v1148
        %v1285 = vunpack.c.l.b16 %v1149
        %v1286 = vunpack.c.l.b16 %v1150
        %v1287 = vunpack.c.l.b16 %v1151
        %v1288 = vunpack.c.l.b16 %v1152
        %v1289 = vunpack.c.l.b16 %v1153
        %v1290 = vunpack.c.l.b16 %v1154
        %v1291 = vunpack.c.l.b16 %v1155
        %v1292 = vunpack.c.l.b16 %v1156
        %v1293 = vunpack.c.l.b16 %v1157
        %v1294 = vunpack.c.l.b16 %v1158
        %v1295 = vunpack.c.l.b16 %v1159
        %v1296 = vunpack.c.l.b16 %v1160
        %v1297 = vpack.c.b16 %v1282, %v1281
        %v1298 = vpack.c.b16 %v1284, %v1283
        %v1299 = vpack.c.b16 %v1286, %v1285
        %v1300 = vpack.c.b16 %v1288, %v1287
        %v1301 = vpack.c.b16 %v1290, %v1289
        %v1302 = vpack.c.b16 %v1292, %v1291
        %v1303 = vpack.c.b16 %v1294, %v1293
        %v1304 = vpack.c.b16 %v1296, %v1295
        %1313 = vmatprep.subr.bf16.mxu0 0
        %1314 = vmatpush1.bf16.msra.mxu0 %v1177
        %1315 = vmatprep.subr.bf16.mxu0 0
        %1316 = vmatpush1.bf16.msra.mxu0 %v1178
        %1317 = vmatprep.subr.bf16.mxu0 0
        %1318 = vmatpush1.bf16.msra.mxu0 %v1179
        %1319 = vmatprep.subr.bf16.mxu0 0
        %1320 = vmatpush1.bf16.msra.mxu0 %v1180
        %1321 = vmatprep.subr.bf16.mxu0 0
        %1322 = vmatpush1.bf16.msra.mxu0 %v1181
        %1323 = vmatprep.subr.bf16.mxu0 0
        %1324 = vmatpush1.bf16.msra.mxu0 %v1182
        %1325 = vmatprep.subr.bf16.mxu0 0
        %1326 = vmatpush1.bf16.msra.mxu0 %v1183
        %1327 = vmatprep.subr.bf16.mxu0 0
        %1328 = vmatpush1.bf16.msra.mxu0 %v1184
        %1329 = vmatprep.subr.bf16.mxu0 0
        %1330 = vmatpush1.bf16.msra.mxu0 0
        %1331 = vmatprep.subr.bf16.mxu0 0
        %1332 = vmatpush1.bf16.msra.mxu0 0
        %1333 = vmatprep.subr.bf16.mxu0 0
        %1334 = vmatpush1.bf16.msra.mxu0 0
        %1335 = vmatprep.subr.bf16.mxu0 0
        %1336 = vmatpush1.bf16.msra.mxu0 0
        %1337 = vmatprep.subr.bf16.mxu0 0
        %1338 = vmatpush1.bf16.msra.mxu0 0
        %1339 = vmatprep.subr.bf16.mxu0 0
        %1340 = vmatpush1.bf16.msra.mxu0 0
        %1341 = vmatprep.subr.bf16.mxu0 0
        %1342 = vmatpush1.bf16.msra.mxu0 0
        %1343 = vmatprep.subr.bf16.mxu0 0
        %1344 = vmatpush1.bf16.msra.mxu0 0
        %1345 = vmatprep.mubr.bf16.mxu0 0
        %1346 = vmatmul.mubr.bf16.gmra.mrb[0].mxu0 %v1297
        %v1347 = vpop.f32.mrb[0].mxu0
        %v1348 = vadd.f32 %v1188, %v1347
        %v1349 = vpop.f32.mrb[0].mxu0
        %v1350 = vpop.f32.mrb[0].mxu0
        %v1351 = vadd.f32 %v1193, %v1350
        %v1352 = vpop.f32.mrb[0].mxu0
        %1353 = vmatprep.mubr.bf16.mxu0 0
        %1354 = vmatmul.mubr.bf16.gmra.mrb[0].mxu0 %v1298
        %v1355 = vpop.f32.mrb[0].mxu0
        %v1356 = vadd.f32 %v1198, %v1355
        %v1357 = vpop.f32.mrb[0].mxu0
        %v1358 = vpop.f32.mrb[0].mxu0
        %v1359 = vadd.f32 %v1203, %v1358
        %v1360 = vpop.f32.mrb[0].mxu0
        %1361 = vmatprep.mubr.bf16.mxu0 0
        %1362 = vmatmul.mubr.bf16.gmra.mrb[0].mxu0 %v1299
        %v1363 = vpop.f32.mrb[0].mxu0
        %v1364 = vadd.f32 %v1208, %v1363
        %v1365 = vpop.f32.mrb[0].mxu0
        %v1366 = vpop.f32.mrb[0].mxu0
        %v1367 = vadd.f32 %v1213, %v1366
        %v1368 = vpop.f32.mrb[0].mxu0
        %1369 = vmatprep.mubr.bf16.mxu0 0
        %1370 = vmatmul.mubr.bf16.gmra.mrb[0].mxu0 %v1300
        %v1371 = vpop.f32.mrb[0].mxu0
        %v1372 = vadd.f32 %v1218, %v1371
        %v1373 = vpop.f32.mrb[0].mxu0
        %v1374 = vpop.f32.mrb[0].mxu0
        %v1375 = vadd.f32 %v1223, %v1374
        %v1376 = vpop.f32.mrb[0].mxu0
        %1377 = vmatprep.mubr.bf16.mxu0 0
        %1378 = vmatmul.mubr.bf16.gmra.mrb[0].mxu0 %v1301
        %v1379 = vpop.f32.mrb[0].mxu0
        %v1380 = vadd.f32 %v1228, %v1379
        %v1381 = vpop.f32.mrb[0].mxu0
        %v1382 = vpop.f32.mrb[0].mxu0
        %v1383 = vadd.f32 %v1233, %v1382
        %v1384 = vpop.f32.mrb[0].mxu0
        %1385 = vmatprep.mubr.bf16.mxu0 0
        %1386 = vmatmul.mubr.bf16.gmra.mrb[0].mxu0 %v1302
        %v1387 = vpop.f32.mrb[0].mxu0
        %v1388 = vadd.f32 %v1238, %v1387
        %v1389 = vpop.f32.mrb[0].mxu0
        %v1390 = vpop.f32.mrb[0].mxu0
        %v1391 = vadd.f32 %v1243, %v1390
        %v1392 = vpop.f32.mrb[0].mxu0
        %1393 = vmatprep.mubr.bf16.mxu0 0
        %1394 = vmatmul.mubr.bf16.gmra.mrb[0].mxu0 %v1303
        %v1395 = vpop.f32.mrb[0].mxu0
        %v1396 = vadd.f32 %v1248, %v1395
        %v1397 = vpop.f32.mrb[0].mxu0
        %v1398 = vpop.f32.mrb[0].mxu0
        %v1399 = vadd.f32 %v1253, %v1398
        %v1400 = vpop.f32.mrb[0].mxu0
        %1401 = vmatprep.mubr.bf16.mxu0 0
        %1402 = vmatmul.mubr.bf16.gmra.mrb[0].mxu0 %v1304
        %v1403 = vpop.f32.mrb[0].mxu0
        %v1404 = vadd.f32 %v1258, %v1403
        %v1405 = vpop.f32.mrb[0].mxu0
        %v1406 = vpop.f32.mrb[0].mxu0
        %v1407 = vadd.f32 %v1263, %v1406
        %v1408 = vpop.f32.mrb[0].mxu0
        %1409 = vdwg.mxu0
        %v1410 = vmax.f32 %v1348, 0.0
        %v1411 = vmax.f32 %v1351, 0.0
        %v1412 = vmax.f32 %v1356, 0.0
        %v1413 = vmax.f32 %v1359, 0.0
        %v1414 = vmax.f32 %v1364, 0.0
        %v1415 = vmax.f32 %v1367, 0.0
        %v1416 = vmax.f32 %v1372, 0.0
        %v1417 = vmax.f32 %v1375, 0.0
        %v1418 = vmax.f32 %v1380, 0.0
        %v1419 = vmax.f32 %v1383, 0.0
        %v1420 = vmax.f32 %v1388, 0.0
        %v1421 = vmax.f32 %v1391, 0.0
        %v1422 = vmax.f32 %v1396, 0.0
        %v1423 = vmax.f32 %v1399, 0.0
        %v1424 = vmax.f32 %v1404, 0.0
        %v1425 = vmax.f32 %v1407, 0.0
        %v1426 = vld [vmem:[%s371] sm:$0xf]
        %v1427 = vld [vmem:[%s371 + $0x4] sm:$0xf]
        %v1428 = vld [vmem:[%s371 + $0x8] sm:$0xf]
        %v1429 = vld [vmem:[%s371 + $0xc] sm:$0xf]
        %v1430 = vld [vmem:[%s371 + $0x10] sm:$0xf]
        %v1431 = vld [vmem:[%s371 + $0x14] sm:$0xf]
        %v1432 = vld [vmem:[%s371 + $0x18] sm:$0xf]
        %v1433 = vld [vmem:[%s371 + $0x1c] sm:$0xf]
        %v1434 = vld [vmem:[%s371 + $0x20] sm:$0xf]
        %v1435 = vld [vmem:[%s371 + $0x24] sm:$0xf]
        %v1436 = vld [vmem:[%s371 + $0x28] sm:$0xf]
        %v1437 = vld [vmem:[%s371 + $0x2c] sm:$0xf]
        %v1438 = vld [vmem:[%s371 + $0x30] sm:$0xf]
        %v1439 = vld [vmem:[%s371 + $0x34] sm:$0xf]
        %v1440 = vld [vmem:[%s371 + $0x38] sm:$0xf]
        %v1441 = vld [vmem:[%s371 + $0x3c] sm:$0xf]
        %v1442 = vld [vmem:[%s380] sm:$0xff]
        %v1443 = vld [vmem:[%s380 + $0x8] sm:$0xff]
        %v1444 = vld [vmem:[%s380 + $0x10] sm:$0xff]
        %v1445 = vld [vmem:[%s380 + $0x18] sm:$0xff]
        %v1446 = vld [vmem:[%s380 + $0x20] sm:$0xff]
        %v1447 = vld [vmem:[%s380 + $0x28] sm:$0xff]
        %v1448 = vld [vmem:[%s380 + $0x30] sm:$0xff]
        %v1449 = vld [vmem:[%s380 + $0x38] sm:$0xff]
        %v1450 = vld [vmem:[%s380 + $0x40] sm:$0xff]
        %v1451 = vld [vmem:[%s380 + $0x48] sm:$0xff]
        %v1452 = vld [vmem:[%s380 + $0x50] sm:$0xff]
        %v1453 = vld [vmem:[%s380 + $0x58] sm:$0xff]
        %v1454 = vld [vmem:[%s380 + $0x60] sm:$0xff]
        %v1455 = vld [vmem:[%s380 + $0x68] sm:$0xff]
        %v1456 = vld [vmem:[%s380 + $0x70] sm:$0xff]
        %v1457 = vld [vmem:[%s380 + $0x78] sm:$0xff]
        %v1458 = vpack.c.bf16 %v1411, %v1410
        %v1459 = vpack.c.bf16 %v1413, %v1412
        %v1460 = vpack.c.bf16 %v1415, %v1414
        %v1461 = vpack.c.bf16 %v1417, %v1416
        %v1462 = vpack.c.bf16 %v1419, %v1418
        %v1463 = vpack.c.bf16 %v1421, %v1420
        %v1464 = vpack.c.bf16 %v1423, %v1422
        %v1465 = vpack.c.bf16 %v1425, %v1424
        %1467 = vset.pattern.permute.xlu0 0
        %1468 = vperm.xlu0 %1467, %v1442
        %v1469 = vpop.permute.xlu0 %1468
        %1472 = vset.pattern.permute.xlu0 0
        %1473 = vperm.xlu0 %1472, %v1443
        %v1474 = vpop.permute.xlu0 %1473
        %1477 = vset.pattern.permute.xlu0 0
        %1478 = vperm.xlu0 %1477, %v1444
        %v1479 = vpop.permute.xlu0 %1478
        %1482 = vset.pattern.permute.xlu0 0
        %1483 = vperm.xlu0 %1482, %v1445
        %v1484 = vpop.permute.xlu0 %1483
        %1487 = vset.pattern.permute.xlu0 0
        %1488 = vperm.xlu0 %1487, %v1446
        %v1489 = vpop.permute.xlu0 %1488
        %1492 = vset.pattern.permute.xlu0 0
        %1493 = vperm.xlu0 %1492, %v1447
        %v1494 = vpop.permute.xlu0 %1493
        %1497 = vset.pattern.permute.xlu0 0
        %1498 = vperm.xlu0 %1497, %v1448
        %v1499 = vpop.permute.xlu0 %1498
        %1502 = vset.pattern.permute.xlu0 0
        %1503 = vperm.xlu0 %1502, %v1449
        %v1504 = vpop.permute.xlu0 %1503
        %1507 = vset.pattern.permute.xlu0 0
        %1508 = vperm.xlu0 %1507, %v1450
        %v1509 = vpop.permute.xlu0 %1508
        %1512 = vset.pattern.permute.xlu0 0
        %1513 = vperm.xlu0 %1512, %v1451
        %v1514 = vpop.permute.xlu0 %1513
        %1517 = vset.pattern.permute.xlu0 0
        %1518 = vperm.xlu0 %1517, %v1452
        %v1519 = vpop.permute.xlu0 %1518
        %1522 = vset.pattern.permute.xlu0 0
        %1523 = vperm.xlu0 %1522, %v1453
        %v1524 = vpop.permute.xlu0 %1523
        %1527 = vset.pattern.permute.xlu0 0
        %1528 = vperm.xlu0 %1527, %v1454
        %v1529 = vpop.permute.xlu0 %1528
        %1532 = vset.pattern.permute.xlu0 0
        %1533 = vperm.xlu0 %1532, %v1455
        %v1534 = vpop.permute.xlu0 %1533
        %1537 = vset.pattern.permute.xlu0 0
        %1538 = vperm.xlu0 %1537, %v1456
        %v1539 = vpop.permute.xlu0 %1538
        %1542 = vset.pattern.permute.xlu0 0
        %1543 = vperm.xlu0 %1542, %v1457
        %v1544 = vpop.permute.xlu0 %1543
        %v1562 = vunpack.c.l.b16 %v1426
        %v1563 = vunpack.c.l.b16 %v1427
        %v1564 = vunpack.c.l.b16 %v1428
        %v1565 = vunpack.c.l.b16 %v1429
        %v1566 = vunpack.c.l.b16 %v1430
        %v1567 = vunpack.c.l.b16 %v1431
        %v1568 = vunpack.c.l.b16 %v1432
        %v1569 = vunpack.c.l.b16 %v1433
        %v1570 = vunpack.c.l.b16 %v1434
        %v1571 = vunpack.c.l.b16 %v1435
        %v1572 = vunpack.c.l.b16 %v1436
        %v1573 = vunpack.c.l.b16 %v1437
        %v1574 = vunpack.c.l.b16 %v1438
        %v1575 = vunpack.c.l.b16 %v1439
        %v1576 = vunpack.c.l.b16 %v1440
        %v1577 = vunpack.c.l.b16 %v1441
        %v1578 = vpack.c.b16 %v1563, %v1562
        %v1579 = vpack.c.b16 %v1565, %v1564
        %v1580 = vpack.c.b16 %v1567, %v1566
        %v1581 = vpack.c.b16 %v1569, %v1568
        %v1582 = vpack.c.b16 %v1571, %v1570
        %v1583 = vpack.c.b16 %v1573, %v1572
        %v1584 = vpack.c.b16 %v1575, %v1574
        %v1585 = vpack.c.b16 %v1577, %v1576
        %1594 = vmatprep.subr.bf16.mxu0 0
        %1595 = vmatpush1.bf16.msra.mxu0 %v1458
        %1596 = vmatprep.subr.bf16.mxu0 0
        %1597 = vmatpush1.bf16.msra.mxu0 %v1459
        %1598 = vmatprep.subr.bf16.mxu0 0
        %1599 = vmatpush1.bf16.msra.mxu0 %v1460
        %1600 = vmatprep.subr.bf16.mxu0 0
        %1601 = vmatpush1.bf16.msra.mxu0 %v1461
        %1602 = vmatprep.subr.bf16.mxu0 0
        %1603 = vmatpush1.bf16.msra.mxu0 %v1462
        %1604 = vmatprep.subr.bf16.mxu0 0
        %1605 = vmatpush1.bf16.msra.mxu0 %v1463
        %1606 = vmatprep.subr.bf16.mxu0 0
        %1607 = vmatpush1.bf16.msra.mxu0 %v1464
        %1608 = vmatprep.subr.bf16.mxu0 0
        %1609 = vmatpush1.bf16.msra.mxu0 %v1465
        %1610 = vmatprep.subr.bf16.mxu0 0
        %1611 = vmatpush1.bf16.msra.mxu0 0
        %1612 = vmatprep.subr.bf16.mxu0 0
        %1613 = vmatpush1.bf16.msra.mxu0 0
        %1614 = vmatprep.subr.bf16.mxu0 0
        %1615 = vmatpush1.bf16.msra.mxu0 0
        %1616 = vmatprep.subr.bf16.mxu0 0
        %1617 = vmatpush1.bf16.msra.mxu0 0
        %1618 = vmatprep.subr.bf16.mxu0 0
        %1619 = vmatpush1.bf16.msra.mxu0 0
        %1620 = vmatprep.subr.bf16.mxu0 0
        %1621 = vmatpush1.bf16.msra.mxu0 0
        %1622 = vmatprep.subr.bf16.mxu0 0
        %1623 = vmatpush1.bf16.msra.mxu0 0
        %1624 = vmatprep.subr.bf16.mxu0 0
        %1625 = vmatpush1.bf16.msra.mxu0 0
        %1626 = vmatprep.mubr.bf16.mxu0 0
        %1627 = vmatmul.mubr.bf16.gmra.mrb[0].mxu0 %v1578
        %v1628 = vpop.f32.mrb[0].mxu0
        %v1629 = vadd.f32 %v1469, %v1628
        %v1630 = vpop.f32.mrb[0].mxu0
        %v1631 = vpop.f32.mrb[0].mxu0
        %v1632 = vadd.f32 %v1474, %v1631
        %v1633 = vpop.f32.mrb[0].mxu0
        %1634 = vmatprep.mubr.bf16.mxu0 0
        %1635 = vmatmul.mubr.bf16.gmra.mrb[0].mxu0 %v1579
        %v1636 = vpop.f32.mrb[0].mxu0
        %v1637 = vadd.f32 %v1479, %v1636
        %v1638 = vpop.f32.mrb[0].mxu0
        %v1639 = vpop.f32.mrb[0].mxu0
        %v1640 = vadd.f32 %v1484, %v1639
        %v1641 = vpop.f32.mrb[0].mxu0
        %1642 = vmatprep.mubr.bf16.mxu0 0
        %1643 = vmatmul.mubr.bf16.gmra.mrb[0].mxu0 %v1580
        %v1644 = vpop.f32.mrb[0].mxu0
        %v1645 = vadd.f32 %v1489, %v1644
        %v1646 = vpop.f32.mrb[0].mxu0
        %v1647 = vpop.f32.mrb[0].mxu0
        %v1648 = vadd.f32 %v1494, %v1647
        %v1649 = vpop.f32.mrb[0].mxu0
        %1650 = vmatprep.mubr.bf16.mxu0 0
        %1651 = vmatmul.mubr.bf16.gmra.mrb[0].mxu0 %v1581
        %v1652 = vpop.f32.mrb[0].mxu0
        %v1653 = vadd.f32 %v1499, %v1652
        %v1654 = vpop.f32.mrb[0].mxu0
        %v1655 = vpop.f32.mrb[0].mxu0
        %v1656 = vadd.f32 %v1504, %v1655
        %v1657 = vpop.f32.mrb[0].mxu0
        %1658 = vmatprep.mubr.bf16.mxu0 0
        %1659 = vmatmul.mubr.bf16.gmra.mrb[0].mxu0 %v1582
        %v1660 = vpop.f32.mrb[0].mxu0
        %v1661 = vadd.f32 %v1509, %v1660
        %v1662 = vpop.f32.mrb[0].mxu0
        %v1663 = vpop.f32.mrb[0].mxu0
        %v1664 = vadd.f32 %v1514, %v1663
        %v1665 = vpop.f32.mrb[0].mxu0
        %1666 = vmatprep.mubr.bf16.mxu0 0
        %1667 = vmatmul.mubr.bf16.gmra.mrb[0].mxu0 %v1583
        %v1668 = vpop.f32.mrb[0].mxu0
        %v1669 = vadd.f32 %v1519, %v1668
        %v1670 = vpop.f32.mrb[0].mxu0
        %v1671 = vpop.f32.mrb[0].mxu0
        %v1672 = vadd.f32 %v1524, %v1671
        %v1673 = vpop.f32.mrb[0].mxu0
        %1674 = vmatprep.mubr.bf16.mxu0 0
        %1675 = vmatmul.mubr.bf16.gmra.mrb[0].mxu0 %v1584
        %v1676 = vpop.f32.mrb[0].mxu0
        %v1677 = vadd.f32 %v1529, %v1676
        %v1678 = vpop.f32.mrb[0].mxu0
        %v1679 = vpop.f32.mrb[0].mxu0
        %v1680 = vadd.f32 %v1534, %v1679
        %v1681 = vpop.f32.mrb[0].mxu0
        %1682 = vmatprep.mubr.bf16.mxu0 0
        %1683 = vmatmul.mubr.bf16.gmra.mrb[0].mxu0 %v1585
        %v1684 = vpop.f32.mrb[0].mxu0
        %v1685 = vadd.f32 %v1539, %v1684
        %v1686 = vpop.f32.mrb[0].mxu0
        %v1687 = vpop.f32.mrb[0].mxu0
        %v1688 = vadd.f32 %v1544, %v1687
        %v1689 = vpop.f32.mrb[0].mxu0
        %1690 = vdwg.mxu0
        %v1691 = vmax.f32 %v1629, 0.0
        %v1692 = vmax.f32 %v1632, 0.0
        %v1693 = vmax.f32 %v1637, 0.0
        %v1694 = vmax.f32 %v1640, 0.0
        %v1695 = vmax.f32 %v1645, 0.0
        %v1696 = vmax.f32 %v1648, 0.0
        %v1697 = vmax.f32 %v1653, 0.0
        %v1698 = vmax.f32 %v1656, 0.0
        %v1699 = vmax.f32 %v1661, 0.0
        %v1700 = vmax.f32 %v1664, 0.0
        %v1701 = vmax.f32 %v1669, 0.0
        %v1702 = vmax.f32 %v1672, 0.0
        %v1703 = vmax.f32 %v1677, 0.0
        %v1704 = vmax.f32 %v1680, 0.0
        %v1705 = vmax.f32 %v1685, 0.0
        %v1706 = vmax.f32 %v1688, 0.0
        %1707 = vst [vmem:[%s342] sm:$0xff] %v1691
        %1708 = vst [vmem:[%s342 + $0x8] sm:$0xff] %v1692
        %1709 = vst [vmem:[%s342 + $0x10] sm:$0xff] %v1693
        %1710 = vst [vmem:[%s342 + $0x18] sm:$0xff] %v1694
        %1711 = vst [vmem:[%s342 + $0x20] sm:$0xff] %v1695
        %1712 = vst [vmem:[%s342 + $0x28] sm:$0xff] %v1696
        %1713 = vst [vmem:[%s342 + $0x30] sm:$0xff] %v1697
        %1714 = vst [vmem:[%s342 + $0x38] sm:$0xff] %v1698
        %1715 = vst [vmem:[%s342 + $0x40] sm:$0xff] %v1699
        %1716 = vst [vmem:[%s342 + $0x48] sm:$0xff] %v1700
        %1717 = vst [vmem:[%s342 + $0x50] sm:$0xff] %v1701
        %1718 = vst [vmem:[%s342 + $0x58] sm:$0xff] %v1702
        %1719 = vst [vmem:[%s342 + $0x60] sm:$0xff] %v1703
        %1720 = vst [vmem:[%s342 + $0x68] sm:$0xff] %v1704
        %1721 = vst [vmem:[%s342 + $0x70] sm:$0xff] %v1705
        %1722 = vst [vmem:[%s342 + $0x78] sm:$0xff] %v1706
        %s1723 = sand.u32 %s195, 1
        %s1724 = scalar_lea.sflag [#allocation3], %s1723
        %s1725 = sand.u32 %s195, 1
        %s1726 = smul.addr %s1725, 128
        %s1727 = scalar_lea.vmem [#allocation2], %s1726
        // Predicated region
        $region45: #{tpu_custom_call.1} parent=43 // pred_check
          %p1728 = pneg %p205
        $region46: #{tpu_custom_call.1} parent=43 // pred_check_branch
          %1730 = sbr.rel (%p1728) target = $region48
        $region47: #{tpu_custom_call.1} parent=43 // pred_region
          %s1732 = ssub.s32 2048, 2048
          %1733 = vsyncadd %s1724, %s1732
          %s1734 = smul.addr %s20, 128
          %s1735 = scalar_lea.hbm %s6, %s1734
          %s1736 = sshll.u32 %s1727, 4
          %s1737 = int_to_ptr.vmem [resolvable:$true] %s1736
          %1742 = dma.vmem_to_hbm [thread:$0]  %s1737, 2048, %s1735, %s1724, 128, 256, 8
        $region48: #{tpu_custom_call.1} parent=43 // pred_fallthru
          _
      $region44: #{tpu_custom_call.1} parent=5 // pred_fallthru
        _
      %p1743 = scmp.le.s32.totalorder 2, %s15
      // Predicated region
      $region49: #{tpu_custom_call.1} parent=5 // pred_check
        %p1744 = pneg %p1743
      $region50: #{tpu_custom_call.1} parent=5 // pred_check_branch
        %1746 = sbr.rel (%p1744) target = $region52
      $region51: #{tpu_custom_call.1} parent=5 // pred_region
        %s1747 = ssub.s32 %s15, 2
        // Predicated region
        $region53: #{tpu_custom_call.1} parent=51 // pred_check
          %p1748 = pneg %p211
        $region54: #{tpu_custom_call.1} parent=51 // pred_check_branch
          %1750 = sbr.rel (%p1748) target = $region56
        $region55: #{tpu_custom_call.1} parent=51 // pred_region
          %s1751 = sand.u32 %s196, 1
          %s1752 = scalar_lea.sflag [#allocation3], %s1751
          %s1753 = sand.u32 %s196, 1
          %s1754 = smul.addr %s1753, 128
          %s1755 = scalar_lea.vmem [#allocation2], %s1754
          %1756 = dma.done %s1752, 2048
        $region56: #{tpu_custom_call.1} parent=51 // pred_fallthru
          _
      $region52: #{tpu_custom_call.1} parent=5 // pred_fallthru
        _
    $region6: #{tpu_custom_call.1} parent=1 // loop_footer
      %s19 = sadd.s32 1, %s15
    $region7: #{tpu_custom_call.1} parent=1 // loop_footer_branch
      %14 = sbr.rel target = $region3
    $region8: #{tpu_custom_call.1} parent=1 // loop_exit
      _
    %1757 = vsyncpa [#allocation3], 1
    %s1758 = scalar_lea.sflag [#allocation3], 1
    %1759 = vsyncpa %s1758, 1

</llo_original>
